<compile_context>
chip_gen: v6e
topology: v6e:2x2x1
jax: 0.10.0
libtpu: 0.0.40
codegen_flags: <defaults>
</compile_context>

<pallas_src>
import jax
import jax.numpy as jnp
from jax.experimental import pallas as pl
from jax.experimental.pallas import tpu as pltpu

LN_EPS = 1e-5
_LANE = 128


def _round_up(a, b):
    return -(-a // b) * b


def _make_final_expand_kernel(s, C, tr, W):
    def kernel(x_ref, w_ref, a_ref, g_ref, b_ref, o_ref):
        # x_ref:  (tn, C)         input pixels for this row tile (tn = tr*W)
        # w_ref:  (C, s*C)        fused expand weight (all p1 slices)
        # a_ref:  (s*C, s*C)      block-diagonal group-averaging matrix (s*s groups of C//s)
        # g_ref:  (1, s*C)        LayerNorm gamma, tiled over groups (f32)
        # b_ref:  (1, s*C)        LayerNorm beta,  tiled over groups (f32)
        # o_ref:  (tr, s, W, C)   output block already in the final layout
        y = jnp.dot(x_ref[...], w_ref[...], preferred_element_type=jnp.float32)   # (tn, s*C)

        # Grouped LayerNorm, two-pass variance, lane-dense via MXU (mem-bound kernel:
        # MXU cycles are free slack).
        mean = jnp.dot(y, a_ref[...], preferred_element_type=jnp.float32)
        yc = y - mean
        var = jnp.dot(yc * yc, a_ref[...], preferred_element_type=jnp.float32)

        out = yc * jax.lax.rsqrt(var + LN_EPS) * g_ref[...] + b_ref[...]
        out = out.astype(o_ref.dtype)

        # Static unroll over p1: lane-slice + free sublane-major reshape (W % 8 == 0),
        # stored into the (tr, s, W, C) block that DMAs to HBM as one contiguous slab.
        for p1 in range(s):
            o_ref[:, p1:p1 + 1, :, :] = (
                out[:, p1 * C:(p1 + 1) * C].reshape(tr, 1, W, C))

    return kernel


def _per_pixel_vmem_bytes(C, s, in_itemsize, out_itemsize):
    """Conservative VMEM bytes per input pixel: double-buffered in/out tiles (lane-padded)
    plus live f32 intermediates (y, centered, stats, out)."""
    c_pad = _round_up(C, _LANE)
    sc_pad = _round_up(s * C, _LANE)
    return (2 * c_pad * in_itemsize          # double-buffered input tile
            + 2 * s * c_pad * out_itemsize   # double-buffered output tile
            + 4 * sc_pad * 4)                # in-kernel f32 intermediates


def _const_vmem_bytes(C, s):
    c_pad = _round_up(C, _LANE)
    sc_pad = _round_up(s * C, _LANE)
    return 2 * 4 * (c_pad * sc_pad + sc_pad * sc_pad + 2 * sc_pad)


def _pick_row_tile(rows, W, C, s, in_itemsize, out_itemsize, *,
                   target_pixels, vmem_budget):
    """Largest row tile tr (divisor of rows) with tr*W input pixels per step such that the
    double-buffered working set fits `vmem_budget`, preferring an even grid (>= 2 steps)
    so both v7x TensorCores get equal work."""
    per_pix = _per_pixel_vmem_bytes(C, s, in_itemsize, out_itemsize)
    budget_px = max(W, (vmem_budget - _const_vmem_bytes(C, s)) // per_pix)
    cap_pixels = max(W, min(target_pixels, budget_px))
    cap_rows = max(1, min(rows, cap_pixels // max(W, 1)))

    def ok(tr, need_even_grid):
        if rows % tr:
            return False
        if (tr * W) % 8 and tr != rows:
            return False
        g = rows // tr
        if need_even_grid and rows >= 2 and (g < 2 or g % 2):
            return False
        return True

    for need_even in (True, False):
        for tr in range(cap_rows, 0, -1):
            if ok(tr, need_even):
                return tr
    # TODO(synk): pad/mask the pixel axis for shapes where no aligned divisor exists.
    return rows


def final_expand(x, expand_weight, ln_gamma, ln_beta, *, dim_scale=4,
                 tile_pixels=8192, vmem_budget=48 * 1024 * 1024):
    """Final_Expand forward.

    x:             (B, H, W, C) NHWC, C == dim (C % dim_scale == 0)
    expand_weight: (dim_scale*C, C)   == nn.Linear(dim, dim_scale*dim, bias=False).weight
    ln_gamma/beta: (C // dim_scale,)
    returns        (B, dim_scale*H, dim_scale*W, C // dim_scale)
    """
    B, H, W, C = x.shape
    s = dim_scale
    assert C % s == 0, "dim must be divisible by dim_scale"
    assert W % 8 == 0, "W must be a multiple of 8 (pad W upstream otherwise)"
    # TODO(synk): pad/mask W to a multiple of 8 instead of asserting.
    c_out = C // s
    assert expand_weight.shape == (s * C, C)
    f32 = jnp.float32

    # Fused expand weight: y[..., o] = sum_k x[..., k] * w_t[k, o], o = (p1, p2, c).
    w_t = jnp.transpose(expand_weight, (1, 0)).astype(x.dtype)            # (C, s*C)
    # Block-diagonal per-group averaging matrix: s*s groups of c_out channels.
    a_mat = jnp.kron(jnp.eye(s * s, dtype=f32),
                     jnp.full((c_out, c_out), 1.0 / c_out, dtype=f32))    # (s*C, s*C)
    g_t = jnp.tile(ln_gamma.astype(f32), s * s).reshape(1, s * C)
    b_t = jnp.tile(ln_beta.astype(f32), s * s).reshape(1, s * C)

    rows = B * H
    in_isz = jnp.dtype(x.dtype).itemsize
    out_isz = in_isz                      # output emitted in the input dtype
    tr = _pick_row_tile(rows, W, C, s, in_isz, out_isz,
                        target_pixels=tile_pixels, vmem_budget=vmem_budget)
    tn = tr * W
    grid = (rows // tr,)

    working_set = (_per_pixel_vmem_bytes(C, s, in_isz, out_isz) * tn
                   + _const_vmem_bytes(C, s))
    vmem_limit = int(max(32 * 1024 * 1024,
                         min(100 * 1024 * 1024, working_set + working_set // 4)))

    x_flat = x.reshape(rows * W, C)       # free row-major reshape

    kernel = _make_final_expand_kernel(s, C, tr, W)

    out_view = pl.pallas_call(
        kernel,
        out_shape=jax.ShapeDtypeStruct((rows, s, W, C), x.dtype),
        grid_spec=pltpu.PrefetchScalarGridSpec(
            num_scalar_prefetch=0,
            grid=grid,
            in_specs=[
                pl.BlockSpec((tn, C), lambda i: (i, 0)),
                pl.BlockSpec((C, s * C), lambda i: (0, 0)),
                pl.BlockSpec((s * C, s * C), lambda i: (0, 0)),
                pl.BlockSpec((1, s * C), lambda i: (0, 0)),
                pl.BlockSpec((1, s * C), lambda i: (0, 0)),
            ],
            # If a v7x bundle/trace shows the writeback DMA exposed, bump the output
            # pipeline depth with pipeline_mode=pl.Buffered(3) here.
            out_specs=pl.BlockSpec((tr, s, W, C), lambda i: (i, 0, 0, 0)),
        ),
        compiler_params=pltpu.CompilerParams(
            dimension_semantics=("parallel",),
            vmem_limit_bytes=vmem_limit,
        ),
    )(x_flat, w_t, a_mat, g_t, b_t)

    # (B*H, s, W, C) row-major == (B, H, p1, W, p2, c_out): final layout is a free reshape.
    return out_view.reshape(B, s * H, s * W, c_out)


def _reference(x, expand_weight, ln_gamma, ln_beta, *, dim_scale=4):
    B, H, W, C = x.shape
    s = dim_scale
    c_out = C // s
    y = jnp.einsum("bhwk,ok->bhwo", x, expand_weight)                 # Linear, no bias
    y = y.reshape(B, H, W, s, s, c_out)
    y = jnp.transpose(y, (0, 1, 3, 2, 4, 5)).reshape(B, s * H, s * W, c_out)
    mean = jnp.mean(y, axis=-1, keepdims=True)
    var = jnp.mean((y - mean) ** 2, axis=-1, keepdims=True)
    return (y - mean) / jnp.sqrt(var + LN_EPS) * ln_gamma + ln_beta


if __name__ == "__main__":
    key = jax.random.PRNGKey(0)
    B, H, W, dim = 2, 16, 16, 32
    dim_scale = 4
    c_out = dim // dim_scale
    k1, k2, k3, k4 = jax.random.split(key, 4)

    x = jax.random.normal(k1, (B, H, W, dim), dtype=jnp.float32)
    # nn.Linear(dim, dim_scale*dim, bias=False).weight : (dim_scale*dim, dim)
    expand_w = (jax.random.normal(k2, (dim_scale * dim, dim), dtype=jnp.float32)
                * (1.0 / jnp.sqrt(float(dim))))
    ln_g = 1.0 + 0.1 * jax.random.normal(k3, (c_out,), dtype=jnp.float32)
    ln_b = 0.1 * jax.random.normal(k4, (c_out,), dtype=jnp.float32)

    run = jax.jit(lambda x_, w_, g_, b_: final_expand(
        x_, w_, g_, b_, dim_scale=dim_scale))
    out = jax.block_until_ready(run(x, expand_w, ln_g, ln_b))

    ref = _reference(x, expand_w, ln_g, ln_b, dim_scale=dim_scale)
    assert out.shape == (B, dim_scale * H, dim_scale * W, c_out), out.shape
    err = float(jnp.max(jnp.abs(out - ref)))
    assert err < 1e-4, err

    print("KERNEL_OK")
</pallas_src>

<mosaic_0001>
module attributes {stable_mosaic.version = 11 : i64} {
  func.func @kernel(%arg0: i32, %arg1: memref<256x32xf32, #tpu.memory_space<vmem>>, %arg2: memref<32x128xf32, #tpu.memory_space<vmem>>, %arg3: memref<128x128xf32, #tpu.memory_space<vmem>>, %arg4: memref<1x128xf32, #tpu.memory_space<vmem>>, %arg5: memref<1x128xf32, #tpu.memory_space<vmem>>, %arg6: memref<16x4x16x32xf32, #tpu.memory_space<vmem>>) attributes {dimension_semantics = [#tpu.dimension_semantics<parallel>], iteration_bounds = array<i64: 2>, scalar_prefetch = 0 : i64, scratch_operands = 0 : i64, tpu.core_type = #tpu.core_type<tc>, window_params = [{transform_indices = @transform_0, window_bounds = array<i64: 256, 32>}, {pipeline_mode = #tpu.pipeline_mode<synchronous>, transform_indices = @transform_1, window_bounds = array<i64: 32, 128>}, {pipeline_mode = #tpu.pipeline_mode<synchronous>, transform_indices = @transform_2, window_bounds = array<i64: 128, 128>}, {pipeline_mode = #tpu.pipeline_mode<synchronous>, transform_indices = @transform_3, window_bounds = array<i64: 1, 128>}, {pipeline_mode = #tpu.pipeline_mode<synchronous>, transform_indices = @transform_4, window_bounds = array<i64: 1, 128>}, {transform_indices = @transform_5, window_bounds = array<i64: 16, 4, 16, 32>}]} {
    %c0 = arith.constant 0 : index
    %c0_0 = arith.constant 0 : index
    %0 = vector.load %arg1[%c0, %c0_0] : memref<256x32xf32, #tpu.memory_space<vmem>>, vector<256x32xf32>
    %c0_1 = arith.constant 0 : index
    %c0_2 = arith.constant 0 : index
    %1 = vector.load %arg2[%c0_1, %c0_2] : memref<32x128xf32, #tpu.memory_space<vmem>>, vector<32x128xf32>
    %cst = arith.constant dense<0.000000e+00> : vector<256x128xf32>
    %2 = tpu.matmul %0, %1, %cst {dimension_numbers = #tpu.dot_dimension_numbers<[1], [0], [0], [1], [0, 0, 1, 1], [], []>} : vector<256x32xf32>, vector<32x128xf32>, vector<256x128xf32> -> vector<256x128xf32>
    %c0_3 = arith.constant 0 : index
    %c0_4 = arith.constant 0 : index
    %3 = vector.load %arg3[%c0_3, %c0_4] : memref<128x128xf32, #tpu.memory_space<vmem>>, vector<128x128xf32>
    %cst_5 = arith.constant dense<0.000000e+00> : vector<256x128xf32>
    %4 = tpu.matmul %2, %3, %cst_5 {dimension_numbers = #tpu.dot_dimension_numbers<[1], [0], [0], [1], [0, 0, 1, 1], [], []>} : vector<256x128xf32>, vector<128x128xf32>, vector<256x128xf32> -> vector<256x128xf32>
    %5 = arith.subf %2, %4 : vector<256x128xf32>
    %6 = arith.mulf %5, %5 : vector<256x128xf32>
    %c0_6 = arith.constant 0 : index
    %c0_7 = arith.constant 0 : index
    %7 = vector.load %arg3[%c0_6, %c0_7] : memref<128x128xf32, #tpu.memory_space<vmem>>, vector<128x128xf32>
    %cst_8 = arith.constant dense<0.000000e+00> : vector<256x128xf32>
    %8 = tpu.matmul %6, %7, %cst_8 {dimension_numbers = #tpu.dot_dimension_numbers<[1], [0], [0], [1], [0, 0, 1, 1], [], []>} : vector<256x128xf32>, vector<128x128xf32>, vector<256x128xf32> -> vector<256x128xf32>
    %cst_9 = arith.constant 9.99999974E-6 : f32
    %9 = vector.broadcast %cst_9 : f32 to vector<256x128xf32>
    %10 = arith.addf %8, %9 : vector<256x128xf32>
    %11 = math.rsqrt %10 : vector<256x128xf32>
    %12 = arith.mulf %5, %11 : vector<256x128xf32>
    %c0_10 = arith.constant 0 : index
    %c0_11 = arith.constant 0 : index
    %13 = vector.load %arg4[%c0_10, %c0_11] : memref<1x128xf32, #tpu.memory_space<vmem>>, vector<1x128xf32>
    %14 = vector.broadcast %13 : vector<1x128xf32> to vector<256x128xf32>
    %15 = arith.mulf %12, %14 : vector<256x128xf32>
    %c0_12 = arith.constant 0 : index
    %c0_13 = arith.constant 0 : index
    %16 = vector.load %arg5[%c0_12, %c0_13] : memref<1x128xf32, #tpu.memory_space<vmem>>, vector<1x128xf32>
    %17 = vector.broadcast %16 : vector<1x128xf32> to vector<256x128xf32>
    %18 = arith.addf %15, %17 : vector<256x128xf32>
    %19 = vector.extract_strided_slice %18 {offsets = [0, 0], sizes = [256, 32], strides = [1, 1]} : vector<256x128xf32> to vector<256x32xf32>
    %20 = vector.shape_cast %19 : vector<256x32xf32> to vector<16x1x16x32xf32>
    %c0_14 = arith.constant 0 : index
    %c0_15 = arith.constant 0 : index
    %c0_16 = arith.constant 0 : index
    %c0_17 = arith.constant 0 : index
    %21 = vector.load %arg6[%c0_14, %c0_15, %c0_16, %c0_17] : memref<16x4x16x32xf32, #tpu.memory_space<vmem>>, vector<16x1x16x32xf32>
    tpu.vector_store %arg6[%c0_14, %c0_15, %c0_16, %c0_17], %20 {strides = array<i32>} : memref<16x4x16x32xf32, #tpu.memory_space<vmem>>, vector<16x1x16x32xf32>,
    %22 = vector.extract_strided_slice %18 {offsets = [0, 32], sizes = [256, 32], strides = [1, 1]} : vector<256x128xf32> to vector<256x32xf32>
    %23 = vector.shape_cast %22 : vector<256x32xf32> to vector<16x1x16x32xf32>
    %c0_18 = arith.constant 0 : index
    %c1 = arith.constant 1 : index
    %c0_19 = arith.constant 0 : index
    %c0_20 = arith.constant 0 : index
    %24 = vector.load %arg6[%c0_18, %c1, %c0_19, %c0_20] : memref<16x4x16x32xf32, #tpu.memory_space<vmem>>, vector<16x1x16x32xf32>
    tpu.vector_store %arg6[%c0_18, %c1, %c0_19, %c0_20], %23 {strides = array<i32>} : memref<16x4x16x32xf32, #tpu.memory_space<vmem>>, vector<16x1x16x32xf32>,
    %25 = vector.extract_strided_slice %18 {offsets = [0, 64], sizes = [256, 32], strides = [1, 1]} : vector<256x128xf32> to vector<256x32xf32>
    %26 = vector.shape_cast %25 : vector<256x32xf32> to vector<16x1x16x32xf32>
    %c0_21 = arith.constant 0 : index
    %c2 = arith.constant 2 : index
    %c0_22 = arith.constant 0 : index
    %c0_23 = arith.constant 0 : index
    %27 = vector.load %arg6[%c0_21, %c2, %c0_22, %c0_23] : memref<16x4x16x32xf32, #tpu.memory_space<vmem>>, vector<16x1x16x32xf32>
    tpu.vector_store %arg6[%c0_21, %c2, %c0_22, %c0_23], %26 {strides = array<i32>} : memref<16x4x16x32xf32, #tpu.memory_space<vmem>>, vector<16x1x16x32xf32>,
    %28 = vector.extract_strided_slice %18 {offsets = [0, 96], sizes = [256, 32], strides = [1, 1]} : vector<256x128xf32> to vector<256x32xf32>
    %29 = vector.shape_cast %28 : vector<256x32xf32> to vector<16x1x16x32xf32>
    %c0_24 = arith.constant 0 : index
    %c3 = arith.constant 3 : index
    %c0_25 = arith.constant 0 : index
    %c0_26 = arith.constant 0 : index
    %30 = vector.load %arg6[%c0_24, %c3, %c0_25, %c0_26] : memref<16x4x16x32xf32, #tpu.memory_space<vmem>>, vector<16x1x16x32xf32>
    tpu.vector_store %arg6[%c0_24, %c3, %c0_25, %c0_26], %29 {strides = array<i32>} : memref<16x4x16x32xf32, #tpu.memory_space<vmem>>, vector<16x1x16x32xf32>,
    return
  }
  func.func @transform_0(%arg0: i32) -> (i32, i32) {
    %c0_i32 = arith.constant 0 : i32
    %c0_i32_0 = arith.constant 0 : i32
    return %arg0, %c0_i32 : i32, i32
  }
  func.func @transform_1(%arg0: i32) -> (i32, i32) {
    %c0_i32 = arith.constant 0 : i32
    %c0_i32_0 = arith.constant 0 : i32
    %c0_i32_1 = arith.constant 0 : i32
    return %c0_i32, %c0_i32_0 : i32, i32
  }
  func.func @transform_2(%arg0: i32) -> (i32, i32) {
    %c0_i32 = arith.constant 0 : i32
    %c0_i32_0 = arith.constant 0 : i32
    %c0_i32_1 = arith.constant 0 : i32
    return %c0_i32, %c0_i32_0 : i32, i32
  }
  func.func @transform_3(%arg0: i32) -> (i32, i32) {
    %c0_i32 = arith.constant 0 : i32
    %c0_i32_0 = arith.constant 0 : i32
    %c0_i32_1 = arith.constant 0 : i32
    return %c0_i32, %c0_i32_0 : i32, i32
  }
  func.func @transform_4(%arg0: i32) -> (i32, i32) {
    %c0_i32 = arith.constant 0 : i32
    %c0_i32_0 = arith.constant 0 : i32
    %c0_i32_1 = arith.constant 0 : i32
    return %c0_i32, %c0_i32_0 : i32, i32
  }
  func.func @transform_5(%arg0: i32) -> (i32, i32, i32, i32) {
    %c0_i32 = arith.constant 0 : i32
    %c0_i32_0 = arith.constant 0 : i32
    %c0_i32_1 = arith.constant 0 : i32
    %c0_i32_2 = arith.constant 0 : i32
    return %arg0, %c0_i32, %c0_i32_0, %c0_i32_1 : i32, i32, i32, i32
  }
}

</mosaic_0001>

<llo_original>
// kernel: tile.13
$region0: #{tile.13}
  #allocation2 [shape = 's32[1]{0}', space=sflag, size = 0x4, scoped, tag = 'scoped memory for tile.13']
  %s0 = inlined_call_operand.hbm [shape: f32[8], index: 0, kind: input, shape index: {}]
  %s1 = inlined_call_operand.vmem [shape: f32[16,8], index: 1, kind: output, shape index: {}]
  $region1: #{tile.13} parent=0
    #allocation0 [shape = 'u8[512]{0}', space=vmem, size = 0x400, scoped, tag = 'operand span for operand 0']
    #allocation1 [shape = 's32[1]{0}', space=sflag, size = 0x4, scoped, tag = 'scoped memory for tile.13']
    %2 = vsyncpa [#allocation1], 0
    // Predicated region
    $region2: #{tile.13} parent=1 // pred_check
      _
    $region3: #{tile.13} parent=1 // pred_check_branch
      %4 = sbr.rel (0) target = $region5
    $region4: #{tile.13} parent=1 // pred_region
      %s6 = ssub.s32 16, 16
      %7 = vsyncadd [#allocation1], %s6
      %s9 = sshll.u32 [#allocation0], 4
      %s10 = int_to_ptr.vmem [resolvable:$true] %s9
      %12 = dma.hbm_to_vmem [thread:$0]  %s0, 16, %s10, [#allocation1]
    $region5: #{tile.13} parent=1 // pred_fallthru
      _
    // Predicated region
    $region6: #{tile.13} parent=1 // pred_check
      _
    $region7: #{tile.13} parent=1 // pred_check_branch
      %14 = sbr.rel (0) target = $region9
    $region8: #{tile.13} parent=1 // pred_region
      %15 = dma.done [#allocation1], 16
    $region9: #{tile.13} parent=1 // pred_fallthru
      _
    %v16 = vld [vmem:[#allocation0] ss:$0 sm:$0xff]
    %17 = vst [vmem:[%s1] sm:$0xff] %v16
    %s18 = scalar_lea.vmem %s1, 8
    %19 = vst [vmem:[%s18] sm:$0xff] %v16
    %20 = vsyncpa [#allocation1], 1

// kernel: tile.14
$region0: #{tile.14}
  %s0 = inlined_call_operand.vmem [shape: f32[16,8], index: 0, kind: input, shape index: {}]
  %s1 = inlined_call_operand.vmem [shape: f32[1,128], index: 1, kind: output, shape index: {}]
  $region1: #{tile.14} parent=0
    #allocation0 [shape = 'u8[4096]{0}', space=vmem, size = 0x1000, scoped, tag = 'scoped mem for output reshape']
    %v2 = vld [vmem:[%s0] sm:$0x1]
    %vm3 = vcmask 64512
    %4 = vst.msk [vmem:[#allocation0] sm:$0x1] %vm3, %v2
    %s5 = scalar_lea.vmem %s0, 15
    %v6 = vld [vmem:[%s5] sm:$0x1]
    %7 = vrot.lane.b32.xlu0 %v6, 120
    %v8 = vpop.permute.xlu0 %7
    %vm9 = vcmask 1048512
    %10 = vst.msk [vmem:[#allocation0] sm:$0x1] %vm9, %v8
    %s11 = scalar_lea.vmem %s0, 14
    %v12 = vld [vmem:[%s11] sm:$0x1]
    %13 = vrot.lane.b32.xlu0 %v12, 112
    %v14 = vpop.permute.xlu0 %13
    %vm15 = vcmask 982912
    %16 = vst.msk [vmem:[#allocation0] sm:$0x1] %vm15, %v14
    %s17 = scalar_lea.vmem %s0, 13
    %v18 = vld [vmem:[%s17] sm:$0x1]
    %19 = vrot.lane.b32.xlu0 %v18, 104
    %v20 = vpop.permute.xlu0 %19
    %vm21 = vcmask 917312
    %22 = vst.msk [vmem:[#allocation0] sm:$0x1] %vm21, %v20
    %s23 = scalar_lea.vmem %s0, 12
    %v24 = vld [vmem:[%s23] sm:$0x1]
    %25 = vrot.lane.b32.xlu0 %v24, 96
    %v26 = vpop.permute.xlu0 %25
    %vm27 = vcmask 851712
    %28 = vst.msk [vmem:[#allocation0] sm:$0x1] %vm27, %v26
    %s29 = scalar_lea.vmem %s0, 11
    %v30 = vld [vmem:[%s29] sm:$0x1]
    %31 = vrot.lane.b32.xlu0 %v30, 88
    %v32 = vpop.permute.xlu0 %31
    %vm33 = vcmask 786112
    %34 = vst.msk [vmem:[#allocation0] sm:$0x1] %vm33, %v32
    %s35 = scalar_lea.vmem %s0, 10
    %v36 = vld [vmem:[%s35] sm:$0x1]
    %37 = vrot.lane.b32.xlu0 %v36, 80
    %v38 = vpop.permute.xlu0 %37
    %vm39 = vcmask 720512
    %40 = vst.msk [vmem:[#allocation0] sm:$0x1] %vm39, %v38
    %s41 = scalar_lea.vmem %s0, 9
    %v42 = vld [vmem:[%s41] sm:$0x1]
    %43 = vrot.lane.b32.xlu0 %v42, 72
    %v44 = vpop.permute.xlu0 %43
    %vm45 = vcmask 654912
    %46 = vst.msk [vmem:[#allocation0] sm:$0x1] %vm45, %v44
    %s47 = scalar_lea.vmem %s0, 8
    %v48 = vld [vmem:[%s47] sm:$0x1]
    %49 = vrot.lane.b32.xlu0 %v48, 64
    %v50 = vpop.permute.xlu0 %49
    %vm51 = vcmask 589312
    %52 = vst.msk [vmem:[#allocation0] sm:$0x1] %vm51, %v50
    %s53 = scalar_lea.vmem %s0, 7
    %v54 = vld [vmem:[%s53] sm:$0x1]
    %55 = vrot.lane.b32.xlu0 %v54, 56
    %v56 = vpop.permute.xlu0 %55
    %vm57 = vcmask 523712
    %58 = vst.msk [vmem:[#allocation0] sm:$0x1] %vm57, %v56
    %s59 = scalar_lea.vmem %s0, 6
    %v60 = vld [vmem:[%s59] sm:$0x1]
    %61 = vrot.lane.b32.xlu0 %v60, 48
    %v62 = vpop.permute.xlu0 %61
    %vm63 = vcmask 458112
    %64 = vst.msk [vmem:[#allocation0] sm:$0x1] %vm63, %v62
    %s65 = scalar_lea.vmem %s0, 5
    %v66 = vld [vmem:[%s65] sm:$0x1]
    %67 = vrot.lane.b32.xlu0 %v66, 40
    %v68 = vpop.permute.xlu0 %67
    %vm69 = vcmask 392512
    %70 = vst.msk [vmem:[#allocation0] sm:$0x1] %vm69, %v68
    %s71 = scalar_lea.vmem %s0, 4
    %v72 = vld [vmem:[%s71] sm:$0x1]
    %73 = vrot.lane.b32.xlu0 %v72, 32
    %v74 = vpop.permute.xlu0 %73
    %vm75 = vcmask 326912
    %76 = vst.msk [vmem:[#allocation0] sm:$0x1] %vm75, %v74
    %s77 = scalar_lea.vmem %s0, 3
    %v78 = vld [vmem:[%s77] sm:$0x1]
    %79 = vrot.lane.b32.xlu0 %v78, 24
    %v80 = vpop.permute.xlu0 %79
    %vm81 = vcmask 261312
    %82 = vst.msk [vmem:[#allocation0] sm:$0x1] %vm81, %v80
    %s83 = scalar_lea.vmem %s0, 2
    %v84 = vld [vmem:[%s83] sm:$0x1]
    %85 = vrot.lane.b32.xlu0 %v84, 16
    %v86 = vpop.permute.xlu0 %85
    %vm87 = vcmask 195712
    %88 = vst.msk [vmem:[#allocation0] sm:$0x1] %vm87, %v86
    %s89 = scalar_lea.vmem %s0, 1
    %v90 = vld [vmem:[%s89] sm:$0x1]
    %91 = vrot.lane.b32.xlu0 %v90, 8
    %v92 = vpop.permute.xlu0 %91
    %vm93 = vcmask 130112
    %94 = vst.msk [vmem:[#allocation0] sm:$0x1] %vm93, %v92
    %s96 = sshll.u32 1, 1
    %s97 = ssub.s32 %s96, 1
    %v99 = vld [vmem:[#allocation0] sm:%s97]
    %s100 = sshll.u32 1, 1
    %s101 = ssub.s32 %s100, 1
    %102 = vst [vmem:[%s1] sm:%s101] %v99

// kernel: _lambda_.1
$region0: #{_lambda_.1}
  #allocation0 [shape = 'u32[]', space=smem, size = 0x4, offset = 0x4, fixed_abs, tag = 'smem constant byte address 0x4 - core index']
  #allocation1 [shape = 'u32[144,128]{1,0:T(1,128)}', space=vmem, size = 0x12000, scoped, tag = 'internal scratch']
  %s0 = inlined_call_operand.hbm [shape: f32[512,32], index: 0, kind: input, shape index: {}]
  %s1 = inlined_call_operand.hbm [shape: f32[32,128], index: 1, kind: input, shape index: {}]
  %s2 = inlined_call_operand.vmem [shape: f32[128,128], index: 2, kind: input, shape index: {}]
  %s3 = inlined_call_operand.vmem [shape: f32[1,128], index: 3, kind: input, shape index: {}]
  %s4 = inlined_call_operand.vmem [shape: f32[1,128], index: 4, kind: input, shape index: {}]
  %s5 = inlined_call_operand.vmem [shape: f32[32,4,16,32], index: 5, kind: output, shape index: {}]
  %s6 = sld [smem:[#allocation0]]
  $region61: #{_lambda_.1} parent=0
    _
  %s8 = ssub.s32 1, %s6
  %s9 = scalar_select 0, %s8, %s6
  $region1: #{_lambda_.1} parent=0
    #allocation2 [shape = 'u8[262144]{0}', space=vmem, size = 0x40000, scoped, tag = 'input window, operand 0']
    #allocation3 [shape = 's32[2]{0}', space=sflag, size = 0x8, scoped, tag = 'scoped memory for _lambda_.1']
    #allocation4 [shape = 'u8[16384]{0}', space=vmem, size = 0x4000, scoped, tag = 'input window, operand 1, single buffered']
    #allocation5 [shape = 's32[1]{0}', space=sflag, size = 0x4, scoped, tag = 'scoped memory for _lambda_.1']
    %10 = vsyncpa [#allocation3], 0
    %s11 = scalar_lea.sflag [#allocation3], 1
    %12 = vsyncpa %s11, 0
    %13 = vsyncpa [#allocation5], 0
    loop: start=0, step=1, limit=4
    $region2: #{_lambda_.1} parent=1 // loop_pre_header
      _
    $region3: #{_lambda_.1} parent=1 // loop_header
      %s15 = sphi 0, %s19
      %p16 = scmp.ge.s32.totalorder %s15, 4
      %s25 = sphi 0, %s27
      %s28 = sphi 0, %s25
      %s29 = sphi 0, %s28
      %s45 = sphi 0, %s29
      %s49 = sphi 0, %s49
      %s51 = sphi 0, %s49
      %s52 = sphi 0, %s51
      %s66 = sphi 0, %s52
      %s70 = sphi 0, %s70
      %s72 = sphi 0, %s70
      %s73 = sphi 0, %s72
      %s87 = sphi 0, %s73
      %s91 = sphi 0, %s91
      %s93 = sphi 0, %s91
      %s94 = sphi 0, %s93
      %s108 = sphi 0, %s94
      %s112 = sphi 0, %s112
      %s114 = sphi 0, %s112
      %s115 = sphi 0, %s114
      %s129 = sphi 0, %s115
      %s135 = sphi 0, %s137
      %s138 = sphi 0, %s135
      %s139 = sphi 0, %s138
      %s155 = sphi 0, %s139
    $region4: #{_lambda_.1} parent=1 // loop_header_branch
      %18 = sbr.rel (%p16) target = $region8
    $region5: #{_lambda_.1} parent=1 // loop_body
      %s20 = ssub.s32 %s15, 1
      %s21 = ssub.s32 %s15, 2
      %s22 = sadd.s32 %s15, 1
      %s23 = ssub.s32 %s15, %s22
      %p24 = scmp.eq.s32.totalorder %s23, 0
      %s26 = sadd.s32 %s25, 1
      %s27 = scalar_select %p24, %s25, %s26
      %p30 = pneg %p24
      %p31 = scmp.eq.s32.totalorder %s15, 1
      %p32 = por %p30, %p31
      %p33 = scmp.ne.s32.totalorder %s25, %s28
      %p34 = scmp.eq.s32.totalorder %s15, 0
      %p35 = por %p33, %p34
      %p36 = scmp.ne.s32.totalorder %s25, %s28
      %p37 = scmp.eq.s32.totalorder %s20, 1
      %p38 = por %p36, %p37
      %p39 = scmp.ne.s32.totalorder %s28, %s29
      %p40 = scmp.eq.s32.totalorder %s20, 0
      %p41 = por %p39, %p40
      %p42 = scmp.ne.s32.totalorder %s28, %s29
      %p43 = scmp.eq.s32.totalorder %s21, 1
      %p44 = por %p42, %p43
      %p46 = scmp.ne.s32.totalorder %s29, %s45
      %p47 = scmp.eq.s32.totalorder %s21, 0
      %p48 = por %p46, %p47
      %s50 = sadd.s32 %s49, 1
      %p53 = scmp.eq.s32.totalorder %s15, 1
      %p54 = scmp.ne.s32.totalorder %s49, %s51
      %p55 = scmp.eq.s32.totalorder %s15, 0
      %p56 = por %p54, %p55
      %p57 = scmp.ne.s32.totalorder %s49, %s51
      %p58 = scmp.eq.s32.totalorder %s20, 1
      %p59 = por %p57, %p58
      %p60 = scmp.ne.s32.totalorder %s51, %s52
      %p61 = scmp.eq.s32.totalorder %s20, 0
      %p62 = por %p60, %p61
      %p63 = scmp.ne.s32.totalorder %s51, %s52
      %p64 = scmp.eq.s32.totalorder %s21, 1
      %p65 = por %p63, %p64
      %p67 = scmp.ne.s32.totalorder %s52, %s66
      %p68 = scmp.eq.s32.totalorder %s21, 0
      %p69 = por %p67, %p68
      %s71 = sadd.s32 %s70, 1
      %p74 = scmp.eq.s32.totalorder %s15, 1
      %p75 = scmp.ne.s32.totalorder %s70, %s72
      %p76 = scmp.eq.s32.totalorder %s15, 0
      %p77 = por %p75, %p76
      %p78 = scmp.ne.s32.totalorder %s70, %s72
      %p79 = scmp.eq.s32.totalorder %s20, 1
      %p80 = por %p78, %p79
      %p81 = scmp.ne.s32.totalorder %s72, %s73
      %p82 = scmp.eq.s32.totalorder %s20, 0
      %p83 = por %p81, %p82
      %p84 = scmp.ne.s32.totalorder %s72, %s73
      %p85 = scmp.eq.s32.totalorder %s21, 1
      %p86 = por %p84, %p85
      %p88 = scmp.ne.s32.totalorder %s73, %s87
      %p89 = scmp.eq.s32.totalorder %s21, 0
      %p90 = por %p88, %p89
      %s92 = sadd.s32 %s91, 1
      %p95 = scmp.eq.s32.totalorder %s15, 1
      %p96 = scmp.ne.s32.totalorder %s91, %s93
      %p97 = scmp.eq.s32.totalorder %s15, 0
      %p98 = por %p96, %p97
      %p99 = scmp.ne.s32.totalorder %s91, %s93
      %p100 = scmp.eq.s32.totalorder %s20, 1
      %p101 = por %p99, %p100
      %p102 = scmp.ne.s32.totalorder %s93, %s94
      %p103 = scmp.eq.s32.totalorder %s20, 0
      %p104 = por %p102, %p103
      %p105 = scmp.ne.s32.totalorder %s93, %s94
      %p106 = scmp.eq.s32.totalorder %s21, 1
      %p107 = por %p105, %p106
      %p109 = scmp.ne.s32.totalorder %s94, %s108
      %p110 = scmp.eq.s32.totalorder %s21, 0
      %p111 = por %p109, %p110
      %s113 = sadd.s32 %s112, 1
      %p116 = scmp.eq.s32.totalorder %s15, 1
      %p117 = scmp.ne.s32.totalorder %s112, %s114
      %p118 = scmp.eq.s32.totalorder %s15, 0
      %p119 = por %p117, %p118
      %p120 = scmp.ne.s32.totalorder %s112, %s114
      %p121 = scmp.eq.s32.totalorder %s20, 1
      %p122 = por %p120, %p121
      %p123 = scmp.ne.s32.totalorder %s114, %s115
      %p124 = scmp.eq.s32.totalorder %s20, 0
      %p125 = por %p123, %p124
      %p126 = scmp.ne.s32.totalorder %s114, %s115
      %p127 = scmp.eq.s32.totalorder %s21, 1
      %p128 = por %p126, %p127
      %p130 = scmp.ne.s32.totalorder %s115, %s129
      %p131 = scmp.eq.s32.totalorder %s21, 0
      %p132 = por %p130, %p131
      %s133 = ssub.s32 %s15, %s22
      %p134 = scmp.eq.s32.totalorder %s133, 0
      %s136 = sadd.s32 %s135, 1
      %s137 = scalar_select %p134, %s135, %s136
      %p140 = pneg %p134
      %p141 = scmp.eq.s32.totalorder %s15, 1
      %p142 = por %p140, %p141
      %p143 = scmp.ne.s32.totalorder %s135, %s138
      %p144 = scmp.eq.s32.totalorder %s15, 0
      %p145 = por %p143, %p144
      %p146 = scmp.ne.s32.totalorder %s135, %s138
      %p147 = scmp.eq.s32.totalorder %s20, 1
      %p148 = por %p146, %p147
      %p149 = scmp.ne.s32.totalorder %s138, %s139
      %p150 = scmp.eq.s32.totalorder %s20, 0
      %p151 = por %p149, %p150
      %p152 = scmp.ne.s32.totalorder %s138, %s139
      %p153 = scmp.eq.s32.totalorder %s21, 1
      %p154 = por %p152, %p153
      %p156 = scmp.ne.s32.totalorder %s139, %s155
      %p157 = scmp.eq.s32.totalorder %s21, 0
      %p158 = por %p156, %p157
      %p159 = scmp.le.s32.totalorder 1, %s15
      %p160 = scmp.lt.s32.totalorder %s15, 3
      %p161 = pnand %p159, %p160
      %p162 = pneg %p161
      // Predicated region
      $region9: #{_lambda_.1} parent=5 // pred_check
        _
      $region10: #{_lambda_.1} parent=5 // pred_check_branch
        %164 = sbr.rel (%p161) target = $region12
      $region11: #{_lambda_.1} parent=5 // pred_region
        %s165 = ssub.s32 %s15, 1
        // Predicated region
        $region13: #{_lambda_.1} parent=11 // pred_check
          %p166 = pneg %p62
        $region14: #{_lambda_.1} parent=11 // pred_check_branch
          %168 = sbr.rel (%p166) target = $region16
        $region15: #{_lambda_.1} parent=11 // pred_region
          %s170 = ssub.s32 512, 512
          %171 = vsyncadd [#allocation5], %s170
          %s172 = sshll.u32 [#allocation4], 4
          %s173 = int_to_ptr.vmem [resolvable:$true] %s172
          %178 = dma.hbm_to_vmem [thread:$0]  %s1, 512, %s173, [#allocation5], 128, 128, 8
        $region16: #{_lambda_.1} parent=11 // pred_fallthru
          _
        // Predicated region
        $region17: #{_lambda_.1} parent=11 // pred_check
          %p179 = pneg %p83
        $region18: #{_lambda_.1} parent=11 // pred_check_branch
          %181 = sbr.rel (%p179) target = $region20
        $region19: #{_lambda_.1} parent=11 // pred_region
          _
        $region20: #{_lambda_.1} parent=11 // pred_fallthru
          _
        // Predicated region
        $region21: #{_lambda_.1} parent=11 // pred_check
          %p182 = pneg %p104
        $region22: #{_lambda_.1} parent=11 // pred_check_branch
          %184 = sbr.rel (%p182) target = $region24
        $region23: #{_lambda_.1} parent=11 // pred_region
          _
        $region24: #{_lambda_.1} parent=11 // pred_fallthru
          _
        // Predicated region
        $region25: #{_lambda_.1} parent=11 // pred_check
          %p185 = pneg %p125
        $region26: #{_lambda_.1} parent=11 // pred_check_branch
          %187 = sbr.rel (%p185) target = $region28
        $region27: #{_lambda_.1} parent=11 // pred_region
          _
        $region28: #{_lambda_.1} parent=11 // pred_fallthru
          _
      $region12: #{_lambda_.1} parent=5 // pred_fallthru
        _
      %p188 = scmp.lt.s32.totalorder %s15, 2
      // Predicated region
      $region29: #{_lambda_.1} parent=5 // pred_check
        %p189 = pneg %p188
      $region30: #{_lambda_.1} parent=5 // pred_check_branch
        %191 = sbr.rel (%p189) target = $region32
      $region31: #{_lambda_.1} parent=5 // pred_region
        // Predicated region
        $region33: #{_lambda_.1} parent=31 // pred_check
          %p192 = pneg %p35
        $region34: #{_lambda_.1} parent=31 // pred_check_branch
          %194 = sbr.rel (%p192) target = $region36
        $region35: #{_lambda_.1} parent=31 // pred_region
          %s195 = sand.u32 %s25, 1
          %s196 = scalar_lea.sflag [#allocation3], %s195
          %s197 = sand.u32 %s25, 1
          %s198 = smul.addr %s197, 256
          %s199 = scalar_lea.vmem [#allocation2], %s198
          %s200 = smul.u32 32, %s15
          %s202 = ssub.s32 4096, 4096
          %203 = vsyncadd %s196, %s202
          %s204 = smul.addr %s200, 128
          %s205 = scalar_lea.hbm %s0, %s204
          %s206 = sshll.u32 %s199, 4
          %s207 = int_to_ptr.vmem [resolvable:$true] %s206
          %212 = dma.hbm_to_vmem [thread:$0]  %s205, 4096, %s207, %s196, 128, 128, 8
        $region36: #{_lambda_.1} parent=31 // pred_fallthru
          _
      $region32: #{_lambda_.1} parent=5 // pred_fallthru
        _
      %p213 = scmp.le.s32.totalorder 1, %s15
      %p214 = scmp.lt.s32.totalorder %s15, 3
      %p215 = pnand %p213, %p214
      %p216 = pneg %p215
      // Predicated region
      $region37: #{_lambda_.1} parent=5 // pred_check
        _
      $region38: #{_lambda_.1} parent=5 // pred_check_branch
        %218 = sbr.rel (%p215) target = $region40
      $region39: #{_lambda_.1} parent=5 // pred_region
        %s219 = ssub.s32 %s15, 1
        %s220 = sand.u32 %s28, 1
        %s221 = scalar_lea.sflag [#allocation3], %s220
        %s222 = sand.u32 %s28, 1
        %s223 = smul.addr %s222, 256
        %s224 = scalar_lea.vmem [#allocation2], %s223
        // Predicated region
        $region41: #{_lambda_.1} parent=39 // pred_check
          %p225 = pneg %p41
        $region42: #{_lambda_.1} parent=39 // pred_check_branch
          %227 = sbr.rel (%p225) target = $region44
        $region43: #{_lambda_.1} parent=39 // pred_region
          %228 = dma.done %s221, 4096
        $region44: #{_lambda_.1} parent=39 // pred_fallthru
          _
        // Predicated region
        $region45: #{_lambda_.1} parent=39 // pred_check
          %p229 = pneg %p62
        $region46: #{_lambda_.1} parent=39 // pred_check_branch
          %231 = sbr.rel (%p229) target = $region48
        $region47: #{_lambda_.1} parent=39 // pred_region
          %232 = dma.done [#allocation5], 512
        $region48: #{_lambda_.1} parent=39 // pred_fallthru
          _
        %s233 = sand.u32 %s28, 1
        %s234 = scalar_lea.sflag [#allocation3], %s233
        %s235 = sand.u32 %s28, 1
        %s236 = smul.addr %s235, 256
        %s237 = scalar_lea.vmem [#allocation2], %s236
        %p238 = pneg %p41
        %p239 = pneg %p38
        %p240 = pneg %p62
        %p241 = pneg %p59
        %p242 = pneg %p83
        %p243 = pneg %p80
        %p244 = pneg %p104
        %p245 = pneg %p101
        %p246 = pneg %p125
        %p247 = pneg %p122
        %p248 = pneg %p151
        %p249 = pneg %p148
        %s250 = smul.u32 16, %s20
        %p251 = scmp.lt.s32.totalorder %s250, 31
        %s252 = scalar_select %p251, %s250, 31
        %s253 = smul.addr %s252, 8
        %s254 = smul.addr %s253, 8
        %s255 = scalar_lea.vmem %s5, %s254
        %s256 = smul.u32 32, %s20
        %s257 = smul.u32 16, %s20
        %p258 = scmp.lt.s32.totalorder %s257, 31
        %s259 = scalar_select %p258, %s257, 31
        %s260 = smul.addr %s259, 8
        %s261 = smul.addr %s260, 8
        %s262 = scalar_lea.vmem %s5, %s261
        %s263 = smul.u32 16, %s20
        %v264 = vld [vmem:[%s224] sm:$0xff]
        %v265 = vld [vmem:[%s224 + $0x8] sm:$0xff]
        %v266 = vld [vmem:[%s224 + $0x10] sm:$0xff]
        %v267 = vld [vmem:[%s224 + $0x18] sm:$0xff]
        %v268 = vld [vmem:[%s224 + $0x20] sm:$0xff]
        %v269 = vld [vmem:[%s224 + $0x28] sm:$0xff]
        %v270 = vld [vmem:[%s224 + $0x30] sm:$0xff]
        %v271 = vld [vmem:[%s224 + $0x38] sm:$0xff]
        %v272 = vld [vmem:[%s224 + $0x40] sm:$0xff]
        %v273 = vld [vmem:[%s224 + $0x48] sm:$0xff]
        %v274 = vld [vmem:[%s224 + $0x50] sm:$0xff]
        %v275 = vld [vmem:[%s224 + $0x58] sm:$0xff]
        %v276 = vld [vmem:[%s224 + $0x60] sm:$0xff]
        %v277 = vld [vmem:[%s224 + $0x68] sm:$0xff]
        %v278 = vld [vmem:[%s224 + $0x70] sm:$0xff]
        %v279 = vld [vmem:[%s224 + $0x78] sm:$0xff]
        %v280 = vld [vmem:[%s224 + $0x80] sm:$0xff]
        %v281 = vld [vmem:[%s224 + $0x88] sm:$0xff]
        %v282 = vld [vmem:[%s224 + $0x90] sm:$0xff]
        %v283 = vld [vmem:[%s224 + $0x98] sm:$0xff]
        %v284 = vld [vmem:[%s224 + $0xa0] sm:$0xff]
        %v285 = vld [vmem:[%s224 + $0xa8] sm:$0xff]
        %v286 = vld [vmem:[%s224 + $0xb0] sm:$0xff]
        %v287 = vld [vmem:[%s224 + $0xb8] sm:$0xff]
        %v288 = vld [vmem:[%s224 + $0xc0] sm:$0xff]
        %v289 = vld [vmem:[%s224 + $0xc8] sm:$0xff]
        %v290 = vld [vmem:[%s224 + $0xd0] sm:$0xff]
        %v291 = vld [vmem:[%s224 + $0xd8] sm:$0xff]
        %v292 = vld [vmem:[%s224 + $0xe0] sm:$0xff]
        %v293 = vld [vmem:[%s224 + $0xe8] sm:$0xff]
        %v294 = vld [vmem:[%s224 + $0xf0] sm:$0xff]
        %v295 = vld [vmem:[%s224 + $0xf8] sm:$0xff]
        %v296 = vld [vmem:[#allocation4] sm:$0xff]
        %v297 = vld [vmem:[#allocation4 + $0x8] sm:$0xff]
        %v298 = vld [vmem:[#allocation4 + $0x10] sm:$0xff]
        %v299 = vld [vmem:[#allocation4 + $0x18] sm:$0xff]
        %vm300 = vcmask 261120
        %v302 = vsel %vm300, %v264, 0
        %v305 = vsel %vm300, %v265, 0
        %v308 = vsel %vm300, %v266, 0
        %v311 = vsel %vm300, %v267, 0
        %v314 = vsel %vm300, %v268, 0
        %v317 = vsel %vm300, %v269, 0
        %v320 = vsel %vm300, %v270, 0
        %v323 = vsel %vm300, %v271, 0
        %v326 = vsel %vm300, %v272, 0
        %v329 = vsel %vm300, %v273, 0
        %v332 = vsel %vm300, %v274, 0
        %v335 = vsel %vm300, %v275, 0
        %v338 = vsel %vm300, %v276, 0
        %v341 = vsel %vm300, %v277, 0
        %v344 = vsel %vm300, %v278, 0
        %v347 = vsel %vm300, %v279, 0
        %v350 = vsel %vm300, %v280, 0
        %v353 = vsel %vm300, %v281, 0
        %v356 = vsel %vm300, %v282, 0
        %v359 = vsel %vm300, %v283, 0
        %v362 = vsel %vm300, %v284, 0
        %v365 = vsel %vm300, %v285, 0
        %v368 = vsel %vm300, %v286, 0
        %v371 = vsel %vm300, %v287, 0
        %v374 = vsel %vm300, %v288, 0
        %v377 = vsel %vm300, %v289, 0
        %v380 = vsel %vm300, %v290, 0
        %v383 = vsel %vm300, %v291, 0
        %v386 = vsel %vm300, %v292, 0
        %v389 = vsel %vm300, %v293, 0
        %v392 = vsel %vm300, %v294, 0
        %v395 = vsel %vm300, %v295, 0
        %397 = vmatprep.subr.mxu0 0.0
        %398 = vmatpush1.msra.mxu0 0.0
        %399 = vmatprep.subr.mxu0 0.0
        %400 = vmatpush1.msra.mxu0 0.0
        %401 = vmatprep.subr.mxu0 0.0
        %402 = vmatpush1.msra.mxu0 0.0
        %403 = vmatprep.subr.mxu0 0.0
        %404 = vmatpush1.msra.mxu0 0.0
        %405 = vmatprep.subr.mxu0 0.0
        %406 = vmatpush1.msra.mxu0 0.0
        %407 = vmatprep.subr.mxu0 0.0
        %408 = vmatpush1.msra.mxu0 0.0
        %409 = vmatprep.subr.mxu0 0.0
        %410 = vmatpush1.msra.mxu0 0.0
        %411 = vmatprep.subr.mxu0 0.0
        %412 = vmatpush1.msra.mxu0 0.0
        %413 = vmatprep.subr.mxu0 0.0
        %414 = vmatpush1.msra.mxu0 0.0
        %415 = vmatprep.subr.mxu0 0.0
        %416 = vmatpush1.msra.mxu0 0.0
        %417 = vmatprep.subr.mxu0 0.0
        %418 = vmatpush1.msra.mxu0 0.0
        %419 = vmatprep.subr.mxu0 0.0
        %420 = vmatpush1.msra.mxu0 0.0
        %421 = vmatprep.subr.mxu0 0.0
        %422 = vmatpush1.msra.mxu0 %v299
        %423 = vmatprep.subr.mxu0 0.0
        %424 = vmatpush1.msra.mxu0 %v298
        %425 = vmatprep.subr.mxu0 0.0
        %426 = vmatpush1.msra.mxu0 %v297
        %427 = vmatprep.subr.mxu0 0.0
        %428 = vmatpush1.msra.mxu0 %v296
        %429 = vmatprep.subr.mxu0 0.0
        %430 = vmatpush2.msra.mxu0 0.0
        %431 = vmatprep.subr.mxu0 0.0
        %432 = vmatpush2.msra.mxu0 0.0
        %433 = vmatprep.subr.mxu0 0.0
        %434 = vmatpush2.msra.mxu0 0.0
        %435 = vmatprep.subr.mxu0 0.0
        %436 = vmatpush2.msra.mxu0 0.0
        %437 = vmatprep.subr.mxu0 0.0
        %438 = vmatpush2.msra.mxu0 0.0
        %439 = vmatprep.subr.mxu0 0.0
        %440 = vmatpush2.msra.mxu0 0.0
        %441 = vmatprep.subr.mxu0 0.0
        %442 = vmatpush2.msra.mxu0 0.0
        %443 = vmatprep.subr.mxu0 0.0
        %444 = vmatpush2.msra.mxu0 0.0
        %445 = vmatprep.subr.mxu0 0.0
        %446 = vmatpush2.msra.mxu0 0.0
        %447 = vmatprep.subr.mxu0 0.0
        %448 = vmatpush2.msra.mxu0 0.0
        %449 = vmatprep.subr.mxu0 0.0
        %450 = vmatpush2.msra.mxu0 0.0
        %451 = vmatprep.subr.mxu0 0.0
        %452 = vmatpush2.msra.mxu0 0.0
        %453 = vmatprep.subr.mxu0 0.0
        %454 = vmatpush2.msra.mxu0 0.0
        %455 = vmatprep.subr.mxu0 0.0
        %456 = vmatpush2.msra.mxu0 0.0
        %457 = vmatprep.subr.mxu0 0.0
        %458 = vmatpush2.msra.mxu0 0.0
        %459 = vmatprep.subr.mxu0 0.0
        %460 = vmatpush2.msra.mxu0 0.0
        %461 = vmatprep.mubr.f32.mxu0 0.0
        %462 = vmatmul.mubr.f32.gmra.mxu0 %v302
        %v463 = vpop.f32.mrf.mxu0
        %v464 = vadd.f32 0.0, %v463
        %v465 = vpop.f32.mrf.mxu0
        %466 = vmatprep.mubr.f32.mxu0 0.0
        %467 = vmatmul.mubr.f32.gmra.mxu0 %v305
        %v468 = vpop.f32.mrf.mxu0
        %v469 = vadd.f32 0.0, %v468
        %v470 = vpop.f32.mrf.mxu0
        %471 = vmatprep.mubr.f32.mxu0 0.0
        %472 = vmatmul.mubr.f32.gmra.mxu0 %v308
        %v473 = vpop.f32.mrf.mxu0
        %v474 = vadd.f32 0.0, %v473
        %v475 = vpop.f32.mrf.mxu0
        %476 = vmatprep.mubr.f32.mxu0 0.0
        %477 = vmatmul.mubr.f32.gmra.mxu0 %v311
        %v478 = vpop.f32.mrf.mxu0
        %v479 = vadd.f32 0.0, %v478
        %v480 = vpop.f32.mrf.mxu0
        %481 = vmatprep.mubr.f32.mxu0 0.0
        %482 = vmatmul.mubr.f32.gmra.mxu0 %v314
        %v483 = vpop.f32.mrf.mxu0
        %v484 = vadd.f32 0.0, %v483
        %v485 = vpop.f32.mrf.mxu0
        %486 = vmatprep.mubr.f32.mxu0 0.0
        %487 = vmatmul.mubr.f32.gmra.mxu0 %v317
        %v488 = vpop.f32.mrf.mxu0
        %v489 = vadd.f32 0.0, %v488
        %v490 = vpop.f32.mrf.mxu0
        %491 = vmatprep.mubr.f32.mxu0 0.0
        %492 = vmatmul.mubr.f32.gmra.mxu0 %v320
        %v493 = vpop.f32.mrf.mxu0
        %v494 = vadd.f32 0.0, %v493
        %v495 = vpop.f32.mrf.mxu0
        %496 = vmatprep.mubr.f32.mxu0 0.0
        %497 = vmatmul.mubr.f32.gmra.mxu0 %v323
        %v498 = vpop.f32.mrf.mxu0
        %v499 = vadd.f32 0.0, %v498
        %v500 = vpop.f32.mrf.mxu0
        %501 = vmatprep.mubr.f32.mxu0 0.0
        %502 = vmatmul.mubr.f32.gmra.mxu0 %v326
        %v503 = vpop.f32.mrf.mxu0
        %v504 = vadd.f32 0.0, %v503
        %v505 = vpop.f32.mrf.mxu0
        %506 = vmatprep.mubr.f32.mxu0 0.0
        %507 = vmatmul.mubr.f32.gmra.mxu0 %v329
        %v508 = vpop.f32.mrf.mxu0
        %v509 = vadd.f32 0.0, %v508
        %v510 = vpop.f32.mrf.mxu0
        %511 = vmatprep.mubr.f32.mxu0 0.0
        %512 = vmatmul.mubr.f32.gmra.mxu0 %v332
        %v513 = vpop.f32.mrf.mxu0
        %v514 = vadd.f32 0.0, %v513
        %v515 = vpop.f32.mrf.mxu0
        %516 = vmatprep.mubr.f32.mxu0 0.0
        %517 = vmatmul.mubr.f32.gmra.mxu0 %v335
        %v518 = vpop.f32.mrf.mxu0
        %v519 = vadd.f32 0.0, %v518
        %v520 = vpop.f32.mrf.mxu0
        %521 = vmatprep.mubr.f32.mxu0 0.0
        %522 = vmatmul.mubr.f32.gmra.mxu0 %v338
        %v523 = vpop.f32.mrf.mxu0
        %v524 = vadd.f32 0.0, %v523
        %v525 = vpop.f32.mrf.mxu0
        %526 = vmatprep.mubr.f32.mxu0 0.0
        %527 = vmatmul.mubr.f32.gmra.mxu0 %v341
        %v528 = vpop.f32.mrf.mxu0
        %v529 = vadd.f32 0.0, %v528
        %v530 = vpop.f32.mrf.mxu0
        %531 = vmatprep.mubr.f32.mxu0 0.0
        %532 = vmatmul.mubr.f32.gmra.mxu0 %v344
        %v533 = vpop.f32.mrf.mxu0
        %v534 = vadd.f32 0.0, %v533
        %v535 = vpop.f32.mrf.mxu0
        %536 = vmatprep.mubr.f32.mxu0 0.0
        %537 = vmatmul.mubr.f32.gmra.mxu0 %v347
        %v538 = vpop.f32.mrf.mxu0
        %v539 = vadd.f32 0.0, %v538
        %v540 = vpop.f32.mrf.mxu0
        %541 = vmatprep.mubr.f32.mxu0 0.0
        %542 = vmatmul.mubr.f32.gmra.mxu0 %v350
        %v543 = vpop.f32.mrf.mxu0
        %v544 = vadd.f32 0.0, %v543
        %v545 = vpop.f32.mrf.mxu0
        %546 = vmatprep.mubr.f32.mxu0 0.0
        %547 = vmatmul.mubr.f32.gmra.mxu0 %v353
        %v548 = vpop.f32.mrf.mxu0
        %v549 = vadd.f32 0.0, %v548
        %v550 = vpop.f32.mrf.mxu0
        %551 = vmatprep.mubr.f32.mxu0 0.0
        %552 = vmatmul.mubr.f32.gmra.mxu0 %v356
        %v553 = vpop.f32.mrf.mxu0
        %v554 = vadd.f32 0.0, %v553
        %v555 = vpop.f32.mrf.mxu0
        %556 = vmatprep.mubr.f32.mxu0 0.0
        %557 = vmatmul.mubr.f32.gmra.mxu0 %v359
        %v558 = vpop.f32.mrf.mxu0
        %v559 = vadd.f32 0.0, %v558
        %v560 = vpop.f32.mrf.mxu0
        %561 = vmatprep.mubr.f32.mxu0 0.0
        %562 = vmatmul.mubr.f32.gmra.mxu0 %v362
        %v563 = vpop.f32.mrf.mxu0
        %v564 = vadd.f32 0.0, %v563
        %v565 = vpop.f32.mrf.mxu0
        %566 = vmatprep.mubr.f32.mxu0 0.0
        %567 = vmatmul.mubr.f32.gmra.mxu0 %v365
        %v568 = vpop.f32.mrf.mxu0
        %v569 = vadd.f32 0.0, %v568
        %v570 = vpop.f32.mrf.mxu0
        %571 = vmatprep.mubr.f32.mxu0 0.0
        %572 = vmatmul.mubr.f32.gmra.mxu0 %v368
        %v573 = vpop.f32.mrf.mxu0
        %v574 = vadd.f32 0.0, %v573
        %v575 = vpop.f32.mrf.mxu0
        %576 = vmatprep.mubr.f32.mxu0 0.0
        %577 = vmatmul.mubr.f32.gmra.mxu0 %v371
        %v578 = vpop.f32.mrf.mxu0
        %v579 = vadd.f32 0.0, %v578
        %v580 = vpop.f32.mrf.mxu0
        %581 = vmatprep.mubr.f32.mxu0 0.0
        %582 = vmatmul.mubr.f32.gmra.mxu0 %v374
        %v583 = vpop.f32.mrf.mxu0
        %v584 = vadd.f32 0.0, %v583
        %v585 = vpop.f32.mrf.mxu0
        %586 = vmatprep.mubr.f32.mxu0 0.0
        %587 = vmatmul.mubr.f32.gmra.mxu0 %v377
        %v588 = vpop.f32.mrf.mxu0
        %v589 = vadd.f32 0.0, %v588
        %v590 = vpop.f32.mrf.mxu0
        %591 = vmatprep.mubr.f32.mxu0 0.0
        %592 = vmatmul.mubr.f32.gmra.mxu0 %v380
        %v593 = vpop.f32.mrf.mxu0
        %v594 = vadd.f32 0.0, %v593
        %v595 = vpop.f32.mrf.mxu0
        %596 = vmatprep.mubr.f32.mxu0 0.0
        %597 = vmatmul.mubr.f32.gmra.mxu0 %v383
        %v598 = vpop.f32.mrf.mxu0
        %v599 = vadd.f32 0.0, %v598
        %v600 = vpop.f32.mrf.mxu0
        %601 = vmatprep.mubr.f32.mxu0 0.0
        %602 = vmatmul.mubr.f32.gmra.mxu0 %v386
        %v603 = vpop.f32.mrf.mxu0
        %v604 = vadd.f32 0.0, %v603
        %v605 = vpop.f32.mrf.mxu0
        %606 = vmatprep.mubr.f32.mxu0 0.0
        %607 = vmatmul.mubr.f32.gmra.mxu0 %v389
        %v608 = vpop.f32.mrf.mxu0
        %v609 = vadd.f32 0.0, %v608
        %v610 = vpop.f32.mrf.mxu0
        %611 = vmatprep.mubr.f32.mxu0 0.0
        %612 = vmatmul.mubr.f32.gmra.mxu0 %v392
        %v613 = vpop.f32.mrf.mxu0
        %v614 = vadd.f32 0.0, %v613
        %v615 = vpop.f32.mrf.mxu0
        %616 = vmatprep.mubr.f32.mxu0 0.0
        %617 = vmatmul.mubr.f32.gmra.mxu0 %v395
        %v618 = vpop.f32.mrf.mxu0
        %v619 = vadd.f32 0.0, %v618
        %v620 = vpop.f32.mrf.mxu0
        %621 = vdwg.mxu0
        %v622 = vld [vmem:[%s2] sm:$0xff]
        %v623 = vld [vmem:[%s2 + $0x8] sm:$0xff]
        %v624 = vld [vmem:[%s2 + $0x10] sm:$0xff]
        %v625 = vld [vmem:[%s2 + $0x18] sm:$0xff]
        %v626 = vld [vmem:[%s2 + $0x20] sm:$0xff]
        %v627 = vld [vmem:[%s2 + $0x28] sm:$0xff]
        %v628 = vld [vmem:[%s2 + $0x30] sm:$0xff]
        %v629 = vld [vmem:[%s2 + $0x38] sm:$0xff]
        %v630 = vld [vmem:[%s2 + $0x40] sm:$0xff]
        %v631 = vld [vmem:[%s2 + $0x48] sm:$0xff]
        %v632 = vld [vmem:[%s2 + $0x50] sm:$0xff]
        %v633 = vld [vmem:[%s2 + $0x58] sm:$0xff]
        %v634 = vld [vmem:[%s2 + $0x60] sm:$0xff]
        %v635 = vld [vmem:[%s2 + $0x68] sm:$0xff]
        %v636 = vld [vmem:[%s2 + $0x70] sm:$0xff]
        %v637 = vld [vmem:[%s2 + $0x78] sm:$0xff]
        %638 = vmatprep.subr.mxu0 0.0
        %639 = vmatpush1.msra.mxu0 %v637
        %640 = vmatprep.subr.mxu0 0.0
        %641 = vmatpush1.msra.mxu0 %v636
        %642 = vmatprep.subr.mxu0 0.0
        %643 = vmatpush1.msra.mxu0 %v635
        %644 = vmatprep.subr.mxu0 0.0
        %645 = vmatpush1.msra.mxu0 %v634
        %646 = vmatprep.subr.mxu0 0.0
        %647 = vmatpush1.msra.mxu0 %v633
        %648 = vmatprep.subr.mxu0 0.0
        %649 = vmatpush1.msra.mxu0 %v632
        %650 = vmatprep.subr.mxu0 0.0
        %651 = vmatpush1.msra.mxu0 %v631
        %652 = vmatprep.subr.mxu0 0.0
        %653 = vmatpush1.msra.mxu0 %v630
        %654 = vmatprep.subr.mxu0 0.0
        %655 = vmatpush1.msra.mxu0 %v629
        %656 = vmatprep.subr.mxu0 0.0
        %657 = vmatpush1.msra.mxu0 %v628
        %658 = vmatprep.subr.mxu0 0.0
        %659 = vmatpush1.msra.mxu0 %v627
        %660 = vmatprep.subr.mxu0 0.0
        %661 = vmatpush1.msra.mxu0 %v626
        %662 = vmatprep.subr.mxu0 0.0
        %663 = vmatpush1.msra.mxu0 %v625
        %664 = vmatprep.subr.mxu0 0.0
        %665 = vmatpush1.msra.mxu0 %v624
        %666 = vmatprep.subr.mxu0 0.0
        %667 = vmatpush1.msra.mxu0 %v623
        %668 = vmatprep.subr.mxu0 0.0
        %669 = vmatpush1.msra.mxu0 %v622
        %670 = vmatprep.subr.mxu0 0.0
        %671 = vmatpush2.msra.mxu0 0.0
        %672 = vmatprep.subr.mxu0 0.0
        %673 = vmatpush2.msra.mxu0 0.0
        %674 = vmatprep.subr.mxu0 0.0
        %675 = vmatpush2.msra.mxu0 0.0
        %676 = vmatprep.subr.mxu0 0.0
        %677 = vmatpush2.msra.mxu0 0.0
        %678 = vmatprep.subr.mxu0 0.0
        %679 = vmatpush2.msra.mxu0 0.0
        %680 = vmatprep.subr.mxu0 0.0
        %681 = vmatpush2.msra.mxu0 0.0
        %682 = vmatprep.subr.mxu0 0.0
        %683 = vmatpush2.msra.mxu0 0.0
        %684 = vmatprep.subr.mxu0 0.0
        %685 = vmatpush2.msra.mxu0 0.0
        %686 = vmatprep.subr.mxu0 0.0
        %687 = vmatpush2.msra.mxu0 0.0
        %688 = vmatprep.subr.mxu0 0.0
        %689 = vmatpush2.msra.mxu0 0.0
        %690 = vmatprep.subr.mxu0 0.0
        %691 = vmatpush2.msra.mxu0 0.0
        %692 = vmatprep.subr.mxu0 0.0
        %693 = vmatpush2.msra.mxu0 0.0
        %694 = vmatprep.subr.mxu0 0.0
        %695 = vmatpush2.msra.mxu0 0.0
        %696 = vmatprep.subr.mxu0 0.0
        %697 = vmatpush2.msra.mxu0 0.0
        %698 = vmatprep.subr.mxu0 0.0
        %699 = vmatpush2.msra.mxu0 0.0
        %700 = vmatprep.subr.mxu0 0.0
        %701 = vmatpush2.msra.mxu0 0.0
        %702 = vmatprep.mubr.f32.mxu0 0.0
        %703 = vmatmul.mubr.f32.gmra.mxu0 %v464
        %v704 = vpop.f32.mrf.mxu0
        %v705 = vadd.f32 0.0, %v704
        %v706 = vpop.f32.mrf.mxu0
        %707 = vmatprep.mubr.f32.mxu0 0.0
        %708 = vmatmul.mubr.f32.gmra.mxu0 %v469
        %v709 = vpop.f32.mrf.mxu0
        %v710 = vadd.f32 0.0, %v709
        %v711 = vpop.f32.mrf.mxu0
        %712 = vmatprep.mubr.f32.mxu0 0.0
        %713 = vmatmul.mubr.f32.gmra.mxu0 %v474
        %v714 = vpop.f32.mrf.mxu0
        %v715 = vadd.f32 0.0, %v714
        %v716 = vpop.f32.mrf.mxu0
        %717 = vmatprep.mubr.f32.mxu0 0.0
        %718 = vmatmul.mubr.f32.gmra.mxu0 %v479
        %v719 = vpop.f32.mrf.mxu0
        %v720 = vadd.f32 0.0, %v719
        %v721 = vpop.f32.mrf.mxu0
        %722 = vmatprep.mubr.f32.mxu0 0.0
        %723 = vmatmul.mubr.f32.gmra.mxu0 %v484
        %v724 = vpop.f32.mrf.mxu0
        %v725 = vadd.f32 0.0, %v724
        %v726 = vpop.f32.mrf.mxu0
        %727 = vmatprep.mubr.f32.mxu0 0.0
        %728 = vmatmul.mubr.f32.gmra.mxu0 %v489
        %v729 = vpop.f32.mrf.mxu0
        %v730 = vadd.f32 0.0, %v729
        %v731 = vpop.f32.mrf.mxu0
        %732 = vmatprep.mubr.f32.mxu0 0.0
        %733 = vmatmul.mubr.f32.gmra.mxu0 %v494
        %v734 = vpop.f32.mrf.mxu0
        %v735 = vadd.f32 0.0, %v734
        %v736 = vpop.f32.mrf.mxu0
        %737 = vmatprep.mubr.f32.mxu0 0.0
        %738 = vmatmul.mubr.f32.gmra.mxu0 %v499
        %v739 = vpop.f32.mrf.mxu0
        %v740 = vadd.f32 0.0, %v739
        %v741 = vpop.f32.mrf.mxu0
        %742 = vmatprep.mubr.f32.mxu0 0.0
        %743 = vmatmul.mubr.f32.gmra.mxu0 %v504
        %v744 = vpop.f32.mrf.mxu0
        %v745 = vadd.f32 0.0, %v744
        %v746 = vpop.f32.mrf.mxu0
        %747 = vmatprep.mubr.f32.mxu0 0.0
        %748 = vmatmul.mubr.f32.gmra.mxu0 %v509
        %v749 = vpop.f32.mrf.mxu0
        %v750 = vadd.f32 0.0, %v749
        %v751 = vpop.f32.mrf.mxu0
        %752 = vmatprep.mubr.f32.mxu0 0.0
        %753 = vmatmul.mubr.f32.gmra.mxu0 %v514
        %v754 = vpop.f32.mrf.mxu0
        %v755 = vadd.f32 0.0, %v754
        %v756 = vpop.f32.mrf.mxu0
        %757 = vmatprep.mubr.f32.mxu0 0.0
        %758 = vmatmul.mubr.f32.gmra.mxu0 %v519
        %v759 = vpop.f32.mrf.mxu0
        %v760 = vadd.f32 0.0, %v759
        %v761 = vpop.f32.mrf.mxu0
        %762 = vmatprep.mubr.f32.mxu0 0.0
        %763 = vmatmul.mubr.f32.gmra.mxu0 %v524
        %v764 = vpop.f32.mrf.mxu0
        %v765 = vadd.f32 0.0, %v764
        %v766 = vpop.f32.mrf.mxu0
        %767 = vmatprep.mubr.f32.mxu0 0.0
        %768 = vmatmul.mubr.f32.gmra.mxu0 %v529
        %v769 = vpop.f32.mrf.mxu0
        %v770 = vadd.f32 0.0, %v769
        %v771 = vpop.f32.mrf.mxu0
        %772 = vmatprep.mubr.f32.mxu0 0.0
        %773 = vmatmul.mubr.f32.gmra.mxu0 %v534
        %v774 = vpop.f32.mrf.mxu0
        %v775 = vadd.f32 0.0, %v774
        %v776 = vpop.f32.mrf.mxu0
        %777 = vmatprep.mubr.f32.mxu0 0.0
        %778 = vmatmul.mubr.f32.gmra.mxu0 %v539
        %v779 = vpop.f32.mrf.mxu0
        %v780 = vadd.f32 0.0, %v779
        %v781 = vpop.f32.mrf.mxu0
        %782 = vmatprep.mubr.f32.mxu0 0.0
        %783 = vmatmul.mubr.f32.gmra.mxu0 %v544
        %v784 = vpop.f32.mrf.mxu0
        %v785 = vadd.f32 0.0, %v784
        %v786 = vpop.f32.mrf.mxu0
        %787 = vmatprep.mubr.f32.mxu0 0.0
        %788 = vmatmul.mubr.f32.gmra.mxu0 %v549
        %v789 = vpop.f32.mrf.mxu0
        %v790 = vadd.f32 0.0, %v789
        %v791 = vpop.f32.mrf.mxu0
        %792 = vmatprep.mubr.f32.mxu0 0.0
        %793 = vmatmul.mubr.f32.gmra.mxu0 %v554
        %v794 = vpop.f32.mrf.mxu0
        %v795 = vadd.f32 0.0, %v794
        %v796 = vpop.f32.mrf.mxu0
        %797 = vmatprep.mubr.f32.mxu0 0.0
        %798 = vmatmul.mubr.f32.gmra.mxu0 %v559
        %v799 = vpop.f32.mrf.mxu0
        %v800 = vadd.f32 0.0, %v799
        %v801 = vpop.f32.mrf.mxu0
        %802 = vmatprep.mubr.f32.mxu0 0.0
        %803 = vmatmul.mubr.f32.gmra.mxu0 %v564
        %v804 = vpop.f32.mrf.mxu0
        %v805 = vadd.f32 0.0, %v804
        %v806 = vpop.f32.mrf.mxu0
        %807 = vmatprep.mubr.f32.mxu0 0.0
        %808 = vmatmul.mubr.f32.gmra.mxu0 %v569
        %v809 = vpop.f32.mrf.mxu0
        %v810 = vadd.f32 0.0, %v809
        %v811 = vpop.f32.mrf.mxu0
        %812 = vmatprep.mubr.f32.mxu0 0.0
        %813 = vmatmul.mubr.f32.gmra.mxu0 %v574
        %v814 = vpop.f32.mrf.mxu0
        %v815 = vadd.f32 0.0, %v814
        %v816 = vpop.f32.mrf.mxu0
        %817 = vmatprep.mubr.f32.mxu0 0.0
        %818 = vmatmul.mubr.f32.gmra.mxu0 %v579
        %v819 = vpop.f32.mrf.mxu0
        %v820 = vadd.f32 0.0, %v819
        %v821 = vpop.f32.mrf.mxu0
        %822 = vmatprep.mubr.f32.mxu0 0.0
        %823 = vmatmul.mubr.f32.gmra.mxu0 %v584
        %v824 = vpop.f32.mrf.mxu0
        %v825 = vadd.f32 0.0, %v824
        %v826 = vpop.f32.mrf.mxu0
        %827 = vmatprep.mubr.f32.mxu0 0.0
        %828 = vmatmul.mubr.f32.gmra.mxu0 %v589
        %v829 = vpop.f32.mrf.mxu0
        %v830 = vadd.f32 0.0, %v829
        %v831 = vpop.f32.mrf.mxu0
        %832 = vmatprep.mubr.f32.mxu0 0.0
        %833 = vmatmul.mubr.f32.gmra.mxu0 %v594
        %v834 = vpop.f32.mrf.mxu0
        %v835 = vadd.f32 0.0, %v834
        %v836 = vpop.f32.mrf.mxu0
        %837 = vmatprep.mubr.f32.mxu0 0.0
        %838 = vmatmul.mubr.f32.gmra.mxu0 %v599
        %v839 = vpop.f32.mrf.mxu0
        %v840 = vadd.f32 0.0, %v839
        %v841 = vpop.f32.mrf.mxu0
        %842 = vmatprep.mubr.f32.mxu0 0.0
        %843 = vmatmul.mubr.f32.gmra.mxu0 %v604
        %v844 = vpop.f32.mrf.mxu0
        %v845 = vadd.f32 0.0, %v844
        %v846 = vpop.f32.mrf.mxu0
        %847 = vmatprep.mubr.f32.mxu0 0.0
        %848 = vmatmul.mubr.f32.gmra.mxu0 %v609
        %v849 = vpop.f32.mrf.mxu0
        %v850 = vadd.f32 0.0, %v849
        %v851 = vpop.f32.mrf.mxu0
        %852 = vmatprep.mubr.f32.mxu0 0.0
        %853 = vmatmul.mubr.f32.gmra.mxu0 %v614
        %v854 = vpop.f32.mrf.mxu0
        %v855 = vadd.f32 0.0, %v854
        %v856 = vpop.f32.mrf.mxu0
        %857 = vmatprep.mubr.f32.mxu0 0.0
        %858 = vmatmul.mubr.f32.gmra.mxu0 %v619
        %v859 = vpop.f32.mrf.mxu0
        %v860 = vadd.f32 0.0, %v859
        %v861 = vpop.f32.mrf.mxu0
        %862 = vdwg.mxu0
        %v863 = vsub.f32 %v464, %v705
        %v864 = vsub.f32 %v469, %v710
        %v865 = vsub.f32 %v474, %v715
        %v866 = vsub.f32 %v479, %v720
        %v867 = vsub.f32 %v484, %v725
        %v868 = vsub.f32 %v489, %v730
        %v869 = vsub.f32 %v494, %v735
        %v870 = vsub.f32 %v499, %v740
        %v871 = vsub.f32 %v504, %v745
        %v872 = vsub.f32 %v509, %v750
        %v873 = vsub.f32 %v514, %v755
        %v874 = vsub.f32 %v519, %v760
        %v875 = vsub.f32 %v524, %v765
        %v876 = vsub.f32 %v529, %v770
        %v877 = vsub.f32 %v534, %v775
        %v878 = vsub.f32 %v539, %v780
        %v879 = vsub.f32 %v544, %v785
        %v880 = vsub.f32 %v549, %v790
        %v881 = vsub.f32 %v554, %v795
        %v882 = vsub.f32 %v559, %v800
        %v883 = vsub.f32 %v564, %v805
        %v884 = vsub.f32 %v569, %v810
        %v885 = vsub.f32 %v574, %v815
        %v886 = vsub.f32 %v579, %v820
        %v887 = vsub.f32 %v584, %v825
        %v888 = vsub.f32 %v589, %v830
        %v889 = vsub.f32 %v594, %v835
        %v890 = vsub.f32 %v599, %v840
        %v891 = vsub.f32 %v604, %v845
        %v892 = vsub.f32 %v609, %v850
        %v893 = vsub.f32 %v614, %v855
        %v894 = vsub.f32 %v619, %v860
        %v895 = vmul.f32 %v863, %v863
        %v896 = vmul.f32 %v864, %v864
        %v897 = vmul.f32 %v865, %v865
        %v898 = vmul.f32 %v866, %v866
        %v899 = vmul.f32 %v867, %v867
        %v900 = vmul.f32 %v868, %v868
        %v901 = vmul.f32 %v869, %v869
        %v902 = vmul.f32 %v870, %v870
        %v903 = vmul.f32 %v871, %v871
        %v904 = vmul.f32 %v872, %v872
        %v905 = vmul.f32 %v873, %v873
        %v906 = vmul.f32 %v874, %v874
        %v907 = vmul.f32 %v875, %v875
        %v908 = vmul.f32 %v876, %v876
        %v909 = vmul.f32 %v877, %v877
        %v910 = vmul.f32 %v878, %v878
        %v911 = vmul.f32 %v879, %v879
        %v912 = vmul.f32 %v880, %v880
        %v913 = vmul.f32 %v881, %v881
        %v914 = vmul.f32 %v882, %v882
        %v915 = vmul.f32 %v883, %v883
        %v916 = vmul.f32 %v884, %v884
        %v917 = vmul.f32 %v885, %v885
        %v918 = vmul.f32 %v886, %v886
        %v919 = vmul.f32 %v887, %v887
        %v920 = vmul.f32 %v888, %v888
        %v921 = vmul.f32 %v889, %v889
        %v922 = vmul.f32 %v890, %v890
        %v923 = vmul.f32 %v891, %v891
        %v924 = vmul.f32 %v892, %v892
        %v925 = vmul.f32 %v893, %v893
        %v926 = vmul.f32 %v894, %v894
        %927 = vmatprep.subr.mxu0 0.0
        %928 = vmatpush1.msra.mxu0 %v637
        %929 = vmatprep.subr.mxu0 0.0
        %930 = vmatpush1.msra.mxu0 %v636
        %931 = vmatprep.subr.mxu0 0.0
        %932 = vmatpush1.msra.mxu0 %v635
        %933 = vmatprep.subr.mxu0 0.0
        %934 = vmatpush1.msra.mxu0 %v634
        %935 = vmatprep.subr.mxu0 0.0
        %936 = vmatpush1.msra.mxu0 %v633
        %937 = vmatprep.subr.mxu0 0.0
        %938 = vmatpush1.msra.mxu0 %v632
        %939 = vmatprep.subr.mxu0 0.0
        %940 = vmatpush1.msra.mxu0 %v631
        %941 = vmatprep.subr.mxu0 0.0
        %942 = vmatpush1.msra.mxu0 %v630
        %943 = vmatprep.subr.mxu0 0.0
        %944 = vmatpush1.msra.mxu0 %v629
        %945 = vmatprep.subr.mxu0 0.0
        %946 = vmatpush1.msra.mxu0 %v628
        %947 = vmatprep.subr.mxu0 0.0
        %948 = vmatpush1.msra.mxu0 %v627
        %949 = vmatprep.subr.mxu0 0.0
        %950 = vmatpush1.msra.mxu0 %v626
        %951 = vmatprep.subr.mxu0 0.0
        %952 = vmatpush1.msra.mxu0 %v625
        %953 = vmatprep.subr.mxu0 0.0
        %954 = vmatpush1.msra.mxu0 %v624
        %955 = vmatprep.subr.mxu0 0.0
        %956 = vmatpush1.msra.mxu0 %v623
        %957 = vmatprep.subr.mxu0 0.0
        %958 = vmatpush1.msra.mxu0 %v622
        %959 = vmatprep.subr.mxu0 0.0
        %960 = vmatpush2.msra.mxu0 0.0
        %961 = vmatprep.subr.mxu0 0.0
        %962 = vmatpush2.msra.mxu0 0.0
        %963 = vmatprep.subr.mxu0 0.0
        %964 = vmatpush2.msra.mxu0 0.0
        %965 = vmatprep.subr.mxu0 0.0
        %966 = vmatpush2.msra.mxu0 0.0
        %967 = vmatprep.subr.mxu0 0.0
        %968 = vmatpush2.msra.mxu0 0.0
        %969 = vmatprep.subr.mxu0 0.0
        %970 = vmatpush2.msra.mxu0 0.0
        %971 = vmatprep.subr.mxu0 0.0
        %972 = vmatpush2.msra.mxu0 0.0
        %973 = vmatprep.subr.mxu0 0.0
        %974 = vmatpush2.msra.mxu0 0.0
        %975 = vmatprep.subr.mxu0 0.0
        %976 = vmatpush2.msra.mxu0 0.0
        %977 = vmatprep.subr.mxu0 0.0
        %978 = vmatpush2.msra.mxu0 0.0
        %979 = vmatprep.subr.mxu0 0.0
        %980 = vmatpush2.msra.mxu0 0.0
        %981 = vmatprep.subr.mxu0 0.0
        %982 = vmatpush2.msra.mxu0 0.0
        %983 = vmatprep.subr.mxu0 0.0
        %984 = vmatpush2.msra.mxu0 0.0
        %985 = vmatprep.subr.mxu0 0.0
        %986 = vmatpush2.msra.mxu0 0.0
        %987 = vmatprep.subr.mxu0 0.0
        %988 = vmatpush2.msra.mxu0 0.0
        %989 = vmatprep.subr.mxu0 0.0
        %990 = vmatpush2.msra.mxu0 0.0
        %991 = vmatprep.mubr.f32.mxu0 0.0
        %992 = vmatmul.mubr.f32.gmra.mxu0 %v895
        %v993 = vpop.f32.mrf.mxu0
        %v994 = vadd.f32 1e-05, %v993
        %v995 = vpop.f32.mrf.mxu0
        %996 = vmatprep.mubr.f32.mxu0 0.0
        %997 = vmatmul.mubr.f32.gmra.mxu0 %v896
        %v998 = vpop.f32.mrf.mxu0
        %v999 = vadd.f32 1e-05, %v998
        %v1000 = vpop.f32.mrf.mxu0
        %1001 = vmatprep.mubr.f32.mxu0 0.0
        %1002 = vmatmul.mubr.f32.gmra.mxu0 %v897
        %v1003 = vpop.f32.mrf.mxu0
        %v1004 = vadd.f32 1e-05, %v1003
        %v1005 = vpop.f32.mrf.mxu0
        %1006 = vmatprep.mubr.f32.mxu0 0.0
        %1007 = vmatmul.mubr.f32.gmra.mxu0 %v898
        %v1008 = vpop.f32.mrf.mxu0
        %v1009 = vadd.f32 1e-05, %v1008
        %v1010 = vpop.f32.mrf.mxu0
        %1011 = vmatprep.mubr.f32.mxu0 0.0
        %1012 = vmatmul.mubr.f32.gmra.mxu0 %v899
        %v1013 = vpop.f32.mrf.mxu0
        %v1014 = vadd.f32 1e-05, %v1013
        %v1015 = vpop.f32.mrf.mxu0
        %1016 = vmatprep.mubr.f32.mxu0 0.0
        %1017 = vmatmul.mubr.f32.gmra.mxu0 %v900
        %v1018 = vpop.f32.mrf.mxu0
        %v1019 = vadd.f32 1e-05, %v1018
        %v1020 = vpop.f32.mrf.mxu0
        %1021 = vmatprep.mubr.f32.mxu0 0.0
        %1022 = vmatmul.mubr.f32.gmra.mxu0 %v901
        %v1023 = vpop.f32.mrf.mxu0
        %v1024 = vadd.f32 1e-05, %v1023
        %v1025 = vpop.f32.mrf.mxu0
        %1026 = vmatprep.mubr.f32.mxu0 0.0
        %1027 = vmatmul.mubr.f32.gmra.mxu0 %v902
        %v1028 = vpop.f32.mrf.mxu0
        %v1029 = vadd.f32 1e-05, %v1028
        %v1030 = vpop.f32.mrf.mxu0
        %1031 = vmatprep.mubr.f32.mxu0 0.0
        %1032 = vmatmul.mubr.f32.gmra.mxu0 %v903
        %v1033 = vpop.f32.mrf.mxu0
        %v1034 = vadd.f32 1e-05, %v1033
        %v1035 = vpop.f32.mrf.mxu0
        %1036 = vmatprep.mubr.f32.mxu0 0.0
        %1037 = vmatmul.mubr.f32.gmra.mxu0 %v904
        %v1038 = vpop.f32.mrf.mxu0
        %v1039 = vadd.f32 1e-05, %v1038
        %v1040 = vpop.f32.mrf.mxu0
        %1041 = vmatprep.mubr.f32.mxu0 0.0
        %1042 = vmatmul.mubr.f32.gmra.mxu0 %v905
        %v1043 = vpop.f32.mrf.mxu0
        %v1044 = vadd.f32 1e-05, %v1043
        %v1045 = vpop.f32.mrf.mxu0
        %1046 = vmatprep.mubr.f32.mxu0 0.0
        %1047 = vmatmul.mubr.f32.gmra.mxu0 %v906
        %v1048 = vpop.f32.mrf.mxu0
        %v1049 = vadd.f32 1e-05, %v1048
        %v1050 = vpop.f32.mrf.mxu0
        %1051 = vmatprep.mubr.f32.mxu0 0.0
        %1052 = vmatmul.mubr.f32.gmra.mxu0 %v907
        %v1053 = vpop.f32.mrf.mxu0
        %v1054 = vadd.f32 1e-05, %v1053
        %v1055 = vpop.f32.mrf.mxu0
        %1056 = vmatprep.mubr.f32.mxu0 0.0
        %1057 = vmatmul.mubr.f32.gmra.mxu0 %v908
        %v1058 = vpop.f32.mrf.mxu0
        %v1059 = vadd.f32 1e-05, %v1058
        %v1060 = vpop.f32.mrf.mxu0
        %1061 = vmatprep.mubr.f32.mxu0 0.0
        %1062 = vmatmul.mubr.f32.gmra.mxu0 %v909
        %v1063 = vpop.f32.mrf.mxu0
        %v1064 = vadd.f32 1e-05, %v1063
        %v1065 = vpop.f32.mrf.mxu0
        %1066 = vmatprep.mubr.f32.mxu0 0.0
        %1067 = vmatmul.mubr.f32.gmra.mxu0 %v910
        %v1068 = vpop.f32.mrf.mxu0
        %v1069 = vadd.f32 1e-05, %v1068
        %v1070 = vpop.f32.mrf.mxu0
        %1071 = vmatprep.mubr.f32.mxu0 0.0
        %1072 = vmatmul.mubr.f32.gmra.mxu0 %v911
        %v1073 = vpop.f32.mrf.mxu0
        %v1074 = vadd.f32 1e-05, %v1073
        %v1075 = vpop.f32.mrf.mxu0
        %1076 = vmatprep.mubr.f32.mxu0 0.0
        %1077 = vmatmul.mubr.f32.gmra.mxu0 %v912
        %v1078 = vpop.f32.mrf.mxu0
        %v1079 = vadd.f32 1e-05, %v1078
        %v1080 = vpop.f32.mrf.mxu0
        %1081 = vmatprep.mubr.f32.mxu0 0.0
        %1082 = vmatmul.mubr.f32.gmra.mxu0 %v913
        %v1083 = vpop.f32.mrf.mxu0
        %v1084 = vadd.f32 1e-05, %v1083
        %v1085 = vpop.f32.mrf.mxu0
        %1086 = vmatprep.mubr.f32.mxu0 0.0
        %1087 = vmatmul.mubr.f32.gmra.mxu0 %v914
        %v1088 = vpop.f32.mrf.mxu0
        %v1089 = vadd.f32 1e-05, %v1088
        %v1090 = vpop.f32.mrf.mxu0
        %1091 = vmatprep.mubr.f32.mxu0 0.0
        %1092 = vmatmul.mubr.f32.gmra.mxu0 %v915
        %v1093 = vpop.f32.mrf.mxu0
        %v1094 = vadd.f32 1e-05, %v1093
        %v1095 = vpop.f32.mrf.mxu0
        %1096 = vmatprep.mubr.f32.mxu0 0.0
        %1097 = vmatmul.mubr.f32.gmra.mxu0 %v916
        %v1098 = vpop.f32.mrf.mxu0
        %v1099 = vadd.f32 1e-05, %v1098
        %v1100 = vpop.f32.mrf.mxu0
        %1101 = vmatprep.mubr.f32.mxu0 0.0
        %1102 = vmatmul.mubr.f32.gmra.mxu0 %v917
        %v1103 = vpop.f32.mrf.mxu0
        %v1104 = vadd.f32 1e-05, %v1103
        %v1105 = vpop.f32.mrf.mxu0
        %1106 = vmatprep.mubr.f32.mxu0 0.0
        %1107 = vmatmul.mubr.f32.gmra.mxu0 %v918
        %v1108 = vpop.f32.mrf.mxu0
        %v1109 = vadd.f32 1e-05, %v1108
        %v1110 = vpop.f32.mrf.mxu0
        %1111 = vmatprep.mubr.f32.mxu0 0.0
        %1112 = vmatmul.mubr.f32.gmra.mxu0 %v919
        %v1113 = vpop.f32.mrf.mxu0
        %v1114 = vadd.f32 1e-05, %v1113
        %v1115 = vpop.f32.mrf.mxu0
        %1116 = vmatprep.mubr.f32.mxu0 0.0
        %1117 = vmatmul.mubr.f32.gmra.mxu0 %v920
        %v1118 = vpop.f32.mrf.mxu0
        %v1119 = vadd.f32 1e-05, %v1118
        %v1120 = vpop.f32.mrf.mxu0
        %1121 = vmatprep.mubr.f32.mxu0 0.0
        %1122 = vmatmul.mubr.f32.gmra.mxu0 %v921
        %v1123 = vpop.f32.mrf.mxu0
        %v1124 = vadd.f32 1e-05, %v1123
        %v1125 = vpop.f32.mrf.mxu0
        %1126 = vmatprep.mubr.f32.mxu0 0.0
        %1127 = vmatmul.mubr.f32.gmra.mxu0 %v922
        %v1128 = vpop.f32.mrf.mxu0
        %v1129 = vadd.f32 1e-05, %v1128
        %v1130 = vpop.f32.mrf.mxu0
        %1131 = vmatprep.mubr.f32.mxu0 0.0
        %1132 = vmatmul.mubr.f32.gmra.mxu0 %v923
        %v1133 = vpop.f32.mrf.mxu0
        %v1134 = vadd.f32 1e-05, %v1133
        %v1135 = vpop.f32.mrf.mxu0
        %1136 = vmatprep.mubr.f32.mxu0 0.0
        %1137 = vmatmul.mubr.f32.gmra.mxu0 %v924
        %v1138 = vpop.f32.mrf.mxu0
        %v1139 = vadd.f32 1e-05, %v1138
        %v1140 = vpop.f32.mrf.mxu0
        %1141 = vmatprep.mubr.f32.mxu0 0.0
        %1142 = vmatmul.mubr.f32.gmra.mxu0 %v925
        %v1143 = vpop.f32.mrf.mxu0
        %v1144 = vadd.f32 1e-05, %v1143
        %v1145 = vpop.f32.mrf.mxu0
        %1146 = vmatprep.mubr.f32.mxu0 0.0
        %1147 = vmatmul.mubr.f32.gmra.mxu0 %v926
        %v1148 = vpop.f32.mrf.mxu0
        %v1149 = vadd.f32 1e-05, %v1148
        %v1150 = vpop.f32.mrf.mxu0
        %1151 = vdwg.mxu0
        %v1152 = vrsqrt.pop %v994
        %v1153 = vrsqrt.pop %v999
        %v1154 = vrsqrt.pop %v1004
        %v1155 = vrsqrt.pop %v1009
        %v1156 = vrsqrt.pop %v1014
        %v1157 = vrsqrt.pop %v1019
        %v1158 = vrsqrt.pop %v1024
        %v1159 = vrsqrt.pop %v1029
        %v1160 = vrsqrt.pop %v1034
        %v1161 = vrsqrt.pop %v1039
        %v1162 = vrsqrt.pop %v1044
        %v1163 = vrsqrt.pop %v1049
        %v1164 = vrsqrt.pop %v1054
        %v1165 = vrsqrt.pop %v1059
        %v1166 = vrsqrt.pop %v1064
        %v1167 = vrsqrt.pop %v1069
        %v1168 = vrsqrt.pop %v1074
        %v1169 = vrsqrt.pop %v1079
        %v1170 = vrsqrt.pop %v1084
        %v1171 = vrsqrt.pop %v1089
        %v1172 = vrsqrt.pop %v1094
        %v1173 = vrsqrt.pop %v1099
        %v1174 = vrsqrt.pop %v1104
        %v1175 = vrsqrt.pop %v1109
        %v1176 = vrsqrt.pop %v1114
        %v1177 = vrsqrt.pop %v1119
        %v1178 = vrsqrt.pop %v1124
        %v1179 = vrsqrt.pop %v1129
        %v1180 = vrsqrt.pop %v1134
        %v1181 = vrsqrt.pop %v1139
        %v1182 = vrsqrt.pop %v1144
        %v1183 = vrsqrt.pop %v1149
        %v1184 = vmul.f32 %v863, %v1152
        %v1185 = vmul.f32 %v864, %v1153
        %v1186 = vmul.f32 %v865, %v1154
        %v1187 = vmul.f32 %v866, %v1155
        %v1188 = vmul.f32 %v867, %v1156
        %v1189 = vmul.f32 %v868, %v1157
        %v1190 = vmul.f32 %v869, %v1158
        %v1191 = vmul.f32 %v870, %v1159
        %v1192 = vmul.f32 %v871, %v1160
        %v1193 = vmul.f32 %v872, %v1161
        %v1194 = vmul.f32 %v873, %v1162
        %v1195 = vmul.f32 %v874, %v1163
        %v1196 = vmul.f32 %v875, %v1164
        %v1197 = vmul.f32 %v876, %v1165
        %v1198 = vmul.f32 %v877, %v1166
        %v1199 = vmul.f32 %v878, %v1167
        %v1200 = vmul.f32 %v879, %v1168
        %v1201 = vmul.f32 %v880, %v1169
        %v1202 = vmul.f32 %v881, %v1170
        %v1203 = vmul.f32 %v882, %v1171
        %v1204 = vmul.f32 %v883, %v1172
        %v1205 = vmul.f32 %v884, %v1173
        %v1206 = vmul.f32 %v885, %v1174
        %v1207 = vmul.f32 %v886, %v1175
        %v1208 = vmul.f32 %v887, %v1176
        %v1209 = vmul.f32 %v888, %v1177
        %v1210 = vmul.f32 %v889, %v1178
        %v1211 = vmul.f32 %v890, %v1179
        %v1212 = vmul.f32 %v891, %v1180
        %v1213 = vmul.f32 %v892, %v1181
        %v1214 = vmul.f32 %v893, %v1182
        %v1215 = vmul.f32 %v894, %v1183
        %v1216 = vld [vmem:[%s3] sm:$0x1]
        %v1218 = vlaneseq
        %v1219 = vshrl.u32 %v1218, 7
        %v1220 = vsub.s32 0, %v1219
        %v1221 = vrot.slane %v1216, %v1220
        %v1223 = vmul.f32 %v1184, %v1221
        %v1224 = vmul.f32 %v1185, %v1221
        %v1225 = vmul.f32 %v1186, %v1221
        %v1226 = vmul.f32 %v1187, %v1221
        %v1227 = vmul.f32 %v1188, %v1221
        %v1228 = vmul.f32 %v1189, %v1221
        %v1229 = vmul.f32 %v1190, %v1221
        %v1230 = vmul.f32 %v1191, %v1221
        %v1231 = vmul.f32 %v1192, %v1221
        %v1232 = vmul.f32 %v1193, %v1221
        %v1233 = vmul.f32 %v1194, %v1221
        %v1234 = vmul.f32 %v1195, %v1221
        %v1235 = vmul.f32 %v1196, %v1221
        %v1236 = vmul.f32 %v1197, %v1221
        %v1237 = vmul.f32 %v1198, %v1221
        %v1238 = vmul.f32 %v1199, %v1221
        %v1239 = vmul.f32 %v1200, %v1221
        %v1240 = vmul.f32 %v1201, %v1221
        %v1241 = vmul.f32 %v1202, %v1221
        %v1242 = vmul.f32 %v1203, %v1221
        %v1243 = vmul.f32 %v1204, %v1221
        %v1244 = vmul.f32 %v1205, %v1221
        %v1245 = vmul.f32 %v1206, %v1221
        %v1246 = vmul.f32 %v1207, %v1221
        %v1247 = vmul.f32 %v1208, %v1221
        %v1248 = vmul.f32 %v1209, %v1221
        %v1249 = vmul.f32 %v1210, %v1221
        %v1250 = vmul.f32 %v1211, %v1221
        %v1251 = vmul.f32 %v1212, %v1221
        %v1252 = vmul.f32 %v1213, %v1221
        %v1253 = vmul.f32 %v1214, %v1221
        %v1254 = vmul.f32 %v1215, %v1221
        %v1255 = vld [vmem:[%s4] sm:$0x1]
        %v1257 = vlaneseq
        %v1258 = vshrl.u32 %v1257, 7
        %v1259 = vsub.s32 0, %v1258
        %v1260 = vrot.slane %v1255, %v1259
        %v1262 = vadd.f32 %v1223, %v1260
        %v1263 = vadd.f32 %v1224, %v1260
        %v1264 = vadd.f32 %v1225, %v1260
        %v1265 = vadd.f32 %v1226, %v1260
        %v1266 = vadd.f32 %v1227, %v1260
        %v1267 = vadd.f32 %v1228, %v1260
        %v1268 = vadd.f32 %v1229, %v1260
        %v1269 = vadd.f32 %v1230, %v1260
        %v1270 = vadd.f32 %v1231, %v1260
        %v1271 = vadd.f32 %v1232, %v1260
        %v1272 = vadd.f32 %v1233, %v1260
        %v1273 = vadd.f32 %v1234, %v1260
        %v1274 = vadd.f32 %v1235, %v1260
        %v1275 = vadd.f32 %v1236, %v1260
        %v1276 = vadd.f32 %v1237, %v1260
        %v1277 = vadd.f32 %v1238, %v1260
        %v1278 = vadd.f32 %v1239, %v1260
        %v1279 = vadd.f32 %v1240, %v1260
        %v1280 = vadd.f32 %v1241, %v1260
        %v1281 = vadd.f32 %v1242, %v1260
        %v1282 = vadd.f32 %v1243, %v1260
        %v1283 = vadd.f32 %v1244, %v1260
        %v1284 = vadd.f32 %v1245, %v1260
        %v1285 = vadd.f32 %v1246, %v1260
        %v1286 = vadd.f32 %v1247, %v1260
        %v1287 = vadd.f32 %v1248, %v1260
        %v1288 = vadd.f32 %v1249, %v1260
        %v1289 = vadd.f32 %v1250, %v1260
        %v1290 = vadd.f32 %v1251, %v1260
        %v1291 = vadd.f32 %v1252, %v1260
        %v1292 = vadd.f32 %v1253, %v1260
        %v1293 = vadd.f32 %v1254, %v1260
        %1294 = vst.msk [vmem:[%s262] sm:$0xff] %vm300, %v1262
        %1295 = vst.msk [vmem:[%s262 + $0x8] sm:$0xff] %vm300, %v1263
        %1296 = vst.msk [vmem:[%s262 + $0x40] sm:$0xff] %vm300, %v1264
        %1297 = vst.msk [vmem:[%s262 + $0x48] sm:$0xff] %vm300, %v1265
        %1298 = vst.msk [vmem:[%s262 + $0x80] sm:$0xff] %vm300, %v1266
        %1299 = vst.msk [vmem:[%s262 + $0x88] sm:$0xff] %vm300, %v1267
        %1300 = vst.msk [vmem:[%s262 + $0xc0] sm:$0xff] %vm300, %v1268
        %1301 = vst.msk [vmem:[%s262 + $0xc8] sm:$0xff] %vm300, %v1269
        %1302 = vst.msk [vmem:[%s262 + $0x100] sm:$0xff] %vm300, %v1270
        %1303 = vst.msk [vmem:[%s262 + $0x108] sm:$0xff] %vm300, %v1271
        %1304 = vst.msk [vmem:[%s262 + $0x140] sm:$0xff] %vm300, %v1272
        %1305 = vst.msk [vmem:[%s262 + $0x148] sm:$0xff] %vm300, %v1273
        %1306 = vst.msk [vmem:[%s262 + $0x180] sm:$0xff] %vm300, %v1274
        %1307 = vst.msk [vmem:[%s262 + $0x188] sm:$0xff] %vm300, %v1275
        %1308 = vst.msk [vmem:[%s262 + $0x1c0] sm:$0xff] %vm300, %v1276
        %1309 = vst.msk [vmem:[%s262 + $0x1c8] sm:$0xff] %vm300, %v1277
        %1310 = vst.msk [vmem:[%s262 + $0x200] sm:$0xff] %vm300, %v1278
        %1311 = vst.msk [vmem:[%s262 + $0x208] sm:$0xff] %vm300, %v1279
        %1312 = vst.msk [vmem:[%s262 + $0x240] sm:$0xff] %vm300, %v1280
        %1313 = vst.msk [vmem:[%s262 + $0x248] sm:$0xff] %vm300, %v1281
        %1314 = vst.msk [vmem:[%s262 + $0x280] sm:$0xff] %vm300, %v1282
        %1315 = vst.msk [vmem:[%s262 + $0x288] sm:$0xff] %vm300, %v1283
        %1316 = vst.msk [vmem:[%s262 + $0x2c0] sm:$0xff] %vm300, %v1284
        %1317 = vst.msk [vmem:[%s262 + $0x2c8] sm:$0xff] %vm300, %v1285
        %1318 = vst.msk [vmem:[%s262 + $0x300] sm:$0xff] %vm300, %v1286
        %1319 = vst.msk [vmem:[%s262 + $0x308] sm:$0xff] %vm300, %v1287
        %1320 = vst.msk [vmem:[%s262 + $0x340] sm:$0xff] %vm300, %v1288
        %1321 = vst.msk [vmem:[%s262 + $0x348] sm:$0xff] %vm300, %v1289
        %1322 = vst.msk [vmem:[%s262 + $0x380] sm:$0xff] %vm300, %v1290
        %1323 = vst.msk [vmem:[%s262 + $0x388] sm:$0xff] %vm300, %v1291
        %1324 = vst.msk [vmem:[%s262 + $0x3c0] sm:$0xff] %vm300, %v1292
        %1325 = vst.msk [vmem:[%s262 + $0x3c8] sm:$0xff] %vm300, %v1293
        %1358 = vrot.lane.b32.xlu0 %v1262, 96
        %v1359 = vpop.permute.xlu0 %1358
        %1360 = vrot.lane.b32.xlu0 %v1263, 96
        %v1361 = vpop.permute.xlu0 %1360
        %1362 = vrot.lane.b32.xlu0 %v1264, 96
        %v1363 = vpop.permute.xlu0 %1362
        %1364 = vrot.lane.b32.xlu0 %v1265, 96
        %v1365 = vpop.permute.xlu0 %1364
        %1366 = vrot.lane.b32.xlu0 %v1266, 96
        %v1367 = vpop.permute.xlu0 %1366
        %1368 = vrot.lane.b32.xlu0 %v1267, 96
        %v1369 = vpop.permute.xlu0 %1368
        %1370 = vrot.lane.b32.xlu0 %v1268, 96
        %v1371 = vpop.permute.xlu0 %1370
        %1372 = vrot.lane.b32.xlu0 %v1269, 96
        %v1373 = vpop.permute.xlu0 %1372
        %1374 = vrot.lane.b32.xlu0 %v1270, 96
        %v1375 = vpop.permute.xlu0 %1374
        %1376 = vrot.lane.b32.xlu0 %v1271, 96
        %v1377 = vpop.permute.xlu0 %1376
        %1378 = vrot.lane.b32.xlu0 %v1272, 96
        %v1379 = vpop.permute.xlu0 %1378
        %1380 = vrot.lane.b32.xlu0 %v1273, 96
        %v1381 = vpop.permute.xlu0 %1380
        %1382 = vrot.lane.b32.xlu0 %v1274, 96
        %v1383 = vpop.permute.xlu0 %1382
        %1384 = vrot.lane.b32.xlu0 %v1275, 96
        %v1385 = vpop.permute.xlu0 %1384
        %1386 = vrot.lane.b32.xlu0 %v1276, 96
        %v1387 = vpop.permute.xlu0 %1386
        %1388 = vrot.lane.b32.xlu0 %v1277, 96
        %v1389 = vpop.permute.xlu0 %1388
        %1390 = vrot.lane.b32.xlu0 %v1278, 96
        %v1391 = vpop.permute.xlu0 %1390
        %1392 = vrot.lane.b32.xlu0 %v1279, 96
        %v1393 = vpop.permute.xlu0 %1392
        %1394 = vrot.lane.b32.xlu0 %v1280, 96
        %v1395 = vpop.permute.xlu0 %1394
        %1396 = vrot.lane.b32.xlu0 %v1281, 96
        %v1397 = vpop.permute.xlu0 %1396
        %1398 = vrot.lane.b32.xlu0 %v1282, 96
        %v1399 = vpop.permute.xlu0 %1398
        %1400 = vrot.lane.b32.xlu0 %v1283, 96
        %v1401 = vpop.permute.xlu0 %1400
        %1402 = vrot.lane.b32.xlu0 %v1284, 96
        %v1403 = vpop.permute.xlu0 %1402
        %1404 = vrot.lane.b32.xlu0 %v1285, 96
        %v1405 = vpop.permute.xlu0 %1404
        %1406 = vrot.lane.b32.xlu0 %v1286, 96
        %v1407 = vpop.permute.xlu0 %1406
        %1408 = vrot.lane.b32.xlu0 %v1287, 96
        %v1409 = vpop.permute.xlu0 %1408
        %1410 = vrot.lane.b32.xlu0 %v1288, 96
        %v1411 = vpop.permute.xlu0 %1410
        %1412 = vrot.lane.b32.xlu0 %v1289, 96
        %v1413 = vpop.permute.xlu0 %1412
        %1414 = vrot.lane.b32.xlu0 %v1290, 96
        %v1415 = vpop.permute.xlu0 %1414
        %1416 = vrot.lane.b32.xlu0 %v1291, 96
        %v1417 = vpop.permute.xlu0 %1416
        %1418 = vrot.lane.b32.xlu0 %v1292, 96
        %v1419 = vpop.permute.xlu0 %1418
        %1420 = vrot.lane.b32.xlu0 %v1293, 96
        %v1421 = vpop.permute.xlu0 %1420
        %s1454 = scalar_lea.vmem %s262, 16
        %1455 = vst.msk [vmem:[%s1454] sm:$0xff] %vm300, %v1359
        %1456 = vst.msk [vmem:[%s1454 + $0x8] sm:$0xff] %vm300, %v1361
        %1457 = vst.msk [vmem:[%s1454 + $0x40] sm:$0xff] %vm300, %v1363
        %1458 = vst.msk [vmem:[%s1454 + $0x48] sm:$0xff] %vm300, %v1365
        %1459 = vst.msk [vmem:[%s1454 + $0x80] sm:$0xff] %vm300, %v1367
        %1460 = vst.msk [vmem:[%s1454 + $0x88] sm:$0xff] %vm300, %v1369
        %1461 = vst.msk [vmem:[%s1454 + $0xc0] sm:$0xff] %vm300, %v1371
        %1462 = vst.msk [vmem:[%s1454 + $0xc8] sm:$0xff] %vm300, %v1373
        %1463 = vst.msk [vmem:[%s1454 + $0x100] sm:$0xff] %vm300, %v1375
        %1464 = vst.msk [vmem:[%s1454 + $0x108] sm:$0xff] %vm300, %v1377
        %1465 = vst.msk [vmem:[%s1454 + $0x140] sm:$0xff] %vm300, %v1379
        %1466 = vst.msk [vmem:[%s1454 + $0x148] sm:$0xff] %vm300, %v1381
        %1467 = vst.msk [vmem:[%s1454 + $0x180] sm:$0xff] %vm300, %v1383
        %1468 = vst.msk [vmem:[%s1454 + $0x188] sm:$0xff] %vm300, %v1385
        %1469 = vst.msk [vmem:[%s1454 + $0x1c0] sm:$0xff] %vm300, %v1387
        %1470 = vst.msk [vmem:[%s1454 + $0x1c8] sm:$0xff] %vm300, %v1389
        %1471 = vst.msk [vmem:[%s1454 + $0x200] sm:$0xff] %vm300, %v1391
        %1472 = vst.msk [vmem:[%s1454 + $0x208] sm:$0xff] %vm300, %v1393
        %1473 = vst.msk [vmem:[%s1454 + $0x240] sm:$0xff] %vm300, %v1395
        %1474 = vst.msk [vmem:[%s1454 + $0x248] sm:$0xff] %vm300, %v1397
        %1475 = vst.msk [vmem:[%s1454 + $0x280] sm:$0xff] %vm300, %v1399
        %1476 = vst.msk [vmem:[%s1454 + $0x288] sm:$0xff] %vm300, %v1401
        %1477 = vst.msk [vmem:[%s1454 + $0x2c0] sm:$0xff] %vm300, %v1403
        %1478 = vst.msk [vmem:[%s1454 + $0x2c8] sm:$0xff] %vm300, %v1405
        %1479 = vst.msk [vmem:[%s1454 + $0x300] sm:$0xff] %vm300, %v1407
        %1480 = vst.msk [vmem:[%s1454 + $0x308] sm:$0xff] %vm300, %v1409
        %1481 = vst.msk [vmem:[%s1454 + $0x340] sm:$0xff] %vm300, %v1411
        %1482 = vst.msk [vmem:[%s1454 + $0x348] sm:$0xff] %vm300, %v1413
        %1483 = vst.msk [vmem:[%s1454 + $0x380] sm:$0xff] %vm300, %v1415
        %1484 = vst.msk [vmem:[%s1454 + $0x388] sm:$0xff] %vm300, %v1417
        %1485 = vst.msk [vmem:[%s1454 + $0x3c0] sm:$0xff] %vm300, %v1419
        %1486 = vst.msk [vmem:[%s1454 + $0x3c8] sm:$0xff] %vm300, %v1421
        %1487 = vrot.lane.b32.xlu0 %v1262, 64
        %v1488 = vpop.permute.xlu0 %1487
        %1489 = vrot.lane.b32.xlu0 %v1263, 64
        %v1490 = vpop.permute.xlu0 %1489
        %1491 = vrot.lane.b32.xlu0 %v1264, 64
        %v1492 = vpop.permute.xlu0 %1491
        %1493 = vrot.lane.b32.xlu0 %v1265, 64
        %v1494 = vpop.permute.xlu0 %1493
        %1495 = vrot.lane.b32.xlu0 %v1266, 64
        %v1496 = vpop.permute.xlu0 %1495
        %1497 = vrot.lane.b32.xlu0 %v1267, 64
        %v1498 = vpop.permute.xlu0 %1497
        %1499 = vrot.lane.b32.xlu0 %v1268, 64
        %v1500 = vpop.permute.xlu0 %1499
        %1501 = vrot.lane.b32.xlu0 %v1269, 64
        %v1502 = vpop.permute.xlu0 %1501
        %1503 = vrot.lane.b32.xlu0 %v1270, 64
        %v1504 = vpop.permute.xlu0 %1503
        %1505 = vrot.lane.b32.xlu0 %v1271, 64
        %v1506 = vpop.permute.xlu0 %1505
        %1507 = vrot.lane.b32.xlu0 %v1272, 64
        %v1508 = vpop.permute.xlu0 %1507
        %1509 = vrot.lane.b32.xlu0 %v1273, 64
        %v1510 = vpop.permute.xlu0 %1509
        %1511 = vrot.lane.b32.xlu0 %v1274, 64
        %v1512 = vpop.permute.xlu0 %1511
        %1513 = vrot.lane.b32.xlu0 %v1275, 64
        %v1514 = vpop.permute.xlu0 %1513
        %1515 = vrot.lane.b32.xlu0 %v1276, 64
        %v1516 = vpop.permute.xlu0 %1515
        %1517 = vrot.lane.b32.xlu0 %v1277, 64
        %v1518 = vpop.permute.xlu0 %1517
        %1519 = vrot.lane.b32.xlu0 %v1278, 64
        %v1520 = vpop.permute.xlu0 %1519
        %1521 = vrot.lane.b32.xlu0 %v1279, 64
        %v1522 = vpop.permute.xlu0 %1521
        %1523 = vrot.lane.b32.xlu0 %v1280, 64
        %v1524 = vpop.permute.xlu0 %1523
        %1525 = vrot.lane.b32.xlu0 %v1281, 64
        %v1526 = vpop.permute.xlu0 %1525
        %1527 = vrot.lane.b32.xlu0 %v1282, 64
        %v1528 = vpop.permute.xlu0 %1527
        %1529 = vrot.lane.b32.xlu0 %v1283, 64
        %v1530 = vpop.permute.xlu0 %1529
        %1531 = vrot.lane.b32.xlu0 %v1284, 64
        %v1532 = vpop.permute.xlu0 %1531
        %1533 = vrot.lane.b32.xlu0 %v1285, 64
        %v1534 = vpop.permute.xlu0 %1533
        %1535 = vrot.lane.b32.xlu0 %v1286, 64
        %v1536 = vpop.permute.xlu0 %1535
        %1537 = vrot.lane.b32.xlu0 %v1287, 64
        %v1538 = vpop.permute.xlu0 %1537
        %1539 = vrot.lane.b32.xlu0 %v1288, 64
        %v1540 = vpop.permute.xlu0 %1539
        %1541 = vrot.lane.b32.xlu0 %v1289, 64
        %v1542 = vpop.permute.xlu0 %1541
        %1543 = vrot.lane.b32.xlu0 %v1290, 64
        %v1544 = vpop.permute.xlu0 %1543
        %1545 = vrot.lane.b32.xlu0 %v1291, 64
        %v1546 = vpop.permute.xlu0 %1545
        %1547 = vrot.lane.b32.xlu0 %v1292, 64
        %v1548 = vpop.permute.xlu0 %1547
        %1549 = vrot.lane.b32.xlu0 %v1293, 64
        %v1550 = vpop.permute.xlu0 %1549
        %s1583 = scalar_lea.vmem %s262, 32
        %1584 = vst.msk [vmem:[%s1583] sm:$0xff] %vm300, %v1488
        %1585 = vst.msk [vmem:[%s1583 + $0x8] sm:$0xff] %vm300, %v1490
        %1586 = vst.msk [vmem:[%s1583 + $0x40] sm:$0xff] %vm300, %v1492
        %1587 = vst.msk [vmem:[%s1583 + $0x48] sm:$0xff] %vm300, %v1494
        %1588 = vst.msk [vmem:[%s1583 + $0x80] sm:$0xff] %vm300, %v1496
        %1589 = vst.msk [vmem:[%s1583 + $0x88] sm:$0xff] %vm300, %v1498
        %1590 = vst.msk [vmem:[%s1583 + $0xc0] sm:$0xff] %vm300, %v1500
        %1591 = vst.msk [vmem:[%s1583 + $0xc8] sm:$0xff] %vm300, %v1502
        %1592 = vst.msk [vmem:[%s1583 + $0x100] sm:$0xff] %vm300, %v1504
        %1593 = vst.msk [vmem:[%s1583 + $0x108] sm:$0xff] %vm300, %v1506
        %1594 = vst.msk [vmem:[%s1583 + $0x140] sm:$0xff] %vm300, %v1508
        %1595 = vst.msk [vmem:[%s1583 + $0x148] sm:$0xff] %vm300, %v1510
        %1596 = vst.msk [vmem:[%s1583 + $0x180] sm:$0xff] %vm300, %v1512
        %1597 = vst.msk [vmem:[%s1583 + $0x188] sm:$0xff] %vm300, %v1514
        %1598 = vst.msk [vmem:[%s1583 + $0x1c0] sm:$0xff] %vm300, %v1516
        %1599 = vst.msk [vmem:[%s1583 + $0x1c8] sm:$0xff] %vm300, %v1518
        %1600 = vst.msk [vmem:[%s1583 + $0x200] sm:$0xff] %vm300, %v1520
        %1601 = vst.msk [vmem:[%s1583 + $0x208] sm:$0xff] %vm300, %v1522
        %1602 = vst.msk [vmem:[%s1583 + $0x240] sm:$0xff] %vm300, %v1524
        %1603 = vst.msk [vmem:[%s1583 + $0x248] sm:$0xff] %vm300, %v1526
        %1604 = vst.msk [vmem:[%s1583 + $0x280] sm:$0xff] %vm300, %v1528
        %1605 = vst.msk [vmem:[%s1583 + $0x288] sm:$0xff] %vm300, %v1530
        %1606 = vst.msk [vmem:[%s1583 + $0x2c0] sm:$0xff] %vm300, %v1532
        %1607 = vst.msk [vmem:[%s1583 + $0x2c8] sm:$0xff] %vm300, %v1534
        %1608 = vst.msk [vmem:[%s1583 + $0x300] sm:$0xff] %vm300, %v1536
        %1609 = vst.msk [vmem:[%s1583 + $0x308] sm:$0xff] %vm300, %v1538
        %1610 = vst.msk [vmem:[%s1583 + $0x340] sm:$0xff] %vm300, %v1540
        %1611 = vst.msk [vmem:[%s1583 + $0x348] sm:$0xff] %vm300, %v1542
        %1612 = vst.msk [vmem:[%s1583 + $0x380] sm:$0xff] %vm300, %v1544
        %1613 = vst.msk [vmem:[%s1583 + $0x388] sm:$0xff] %vm300, %v1546
        %1614 = vst.msk [vmem:[%s1583 + $0x3c0] sm:$0xff] %vm300, %v1548
        %1615 = vst.msk [vmem:[%s1583 + $0x3c8] sm:$0xff] %vm300, %v1550
        %1616 = vrot.lane.b32.xlu0 %v1262, 32
        %v1617 = vpop.permute.xlu0 %1616
        %1618 = vrot.lane.b32.xlu0 %v1263, 32
        %v1619 = vpop.permute.xlu0 %1618
        %1620 = vrot.lane.b32.xlu0 %v1264, 32
        %v1621 = vpop.permute.xlu0 %1620
        %1622 = vrot.lane.b32.xlu0 %v1265, 32
        %v1623 = vpop.permute.xlu0 %1622
        %1624 = vrot.lane.b32.xlu0 %v1266, 32
        %v1625 = vpop.permute.xlu0 %1624
        %1626 = vrot.lane.b32.xlu0 %v1267, 32
        %v1627 = vpop.permute.xlu0 %1626
        %1628 = vrot.lane.b32.xlu0 %v1268, 32
        %v1629 = vpop.permute.xlu0 %1628
        %1630 = vrot.lane.b32.xlu0 %v1269, 32
        %v1631 = vpop.permute.xlu0 %1630
        %1632 = vrot.lane.b32.xlu0 %v1270, 32
        %v1633 = vpop.permute.xlu0 %1632
        %1634 = vrot.lane.b32.xlu0 %v1271, 32
        %v1635 = vpop.permute.xlu0 %1634
        %1636 = vrot.lane.b32.xlu0 %v1272, 32
        %v1637 = vpop.permute.xlu0 %1636
        %1638 = vrot.lane.b32.xlu0 %v1273, 32
        %v1639 = vpop.permute.xlu0 %1638
        %1640 = vrot.lane.b32.xlu0 %v1274, 32
        %v1641 = vpop.permute.xlu0 %1640
        %1642 = vrot.lane.b32.xlu0 %v1275, 32
        %v1643 = vpop.permute.xlu0 %1642
        %1644 = vrot.lane.b32.xlu0 %v1276, 32
        %v1645 = vpop.permute.xlu0 %1644
        %1646 = vrot.lane.b32.xlu0 %v1277, 32
        %v1647 = vpop.permute.xlu0 %1646
        %1648 = vrot.lane.b32.xlu0 %v1278, 32
        %v1649 = vpop.permute.xlu0 %1648
        %1650 = vrot.lane.b32.xlu0 %v1279, 32
        %v1651 = vpop.permute.xlu0 %1650
        %1652 = vrot.lane.b32.xlu0 %v1280, 32
        %v1653 = vpop.permute.xlu0 %1652
        %1654 = vrot.lane.b32.xlu0 %v1281, 32
        %v1655 = vpop.permute.xlu0 %1654
        %1656 = vrot.lane.b32.xlu0 %v1282, 32
        %v1657 = vpop.permute.xlu0 %1656
        %1658 = vrot.lane.b32.xlu0 %v1283, 32
        %v1659 = vpop.permute.xlu0 %1658
        %1660 = vrot.lane.b32.xlu0 %v1284, 32
        %v1661 = vpop.permute.xlu0 %1660
        %1662 = vrot.lane.b32.xlu0 %v1285, 32
        %v1663 = vpop.permute.xlu0 %1662
        %1664 = vrot.lane.b32.xlu0 %v1286, 32
        %v1665 = vpop.permute.xlu0 %1664
        %1666 = vrot.lane.b32.xlu0 %v1287, 32
        %v1667 = vpop.permute.xlu0 %1666
        %1668 = vrot.lane.b32.xlu0 %v1288, 32
        %v1669 = vpop.permute.xlu0 %1668
        %1670 = vrot.lane.b32.xlu0 %v1289, 32
        %v1671 = vpop.permute.xlu0 %1670
        %1672 = vrot.lane.b32.xlu0 %v1290, 32
        %v1673 = vpop.permute.xlu0 %1672
        %1674 = vrot.lane.b32.xlu0 %v1291, 32
        %v1675 = vpop.permute.xlu0 %1674
        %1676 = vrot.lane.b32.xlu0 %v1292, 32
        %v1677 = vpop.permute.xlu0 %1676
        %1678 = vrot.lane.b32.xlu0 %v1293, 32
        %v1679 = vpop.permute.xlu0 %1678
        %s1712 = scalar_lea.vmem %s262, 48
        %1713 = vst.msk [vmem:[%s1712] sm:$0xff] %vm300, %v1617
        %1714 = vst.msk [vmem:[%s1712 + $0x8] sm:$0xff] %vm300, %v1619
        %1715 = vst.msk [vmem:[%s1712 + $0x40] sm:$0xff] %vm300, %v1621
        %1716 = vst.msk [vmem:[%s1712 + $0x48] sm:$0xff] %vm300, %v1623
        %1717 = vst.msk [vmem:[%s1712 + $0x80] sm:$0xff] %vm300, %v1625
        %1718 = vst.msk [vmem:[%s1712 + $0x88] sm:$0xff] %vm300, %v1627
        %1719 = vst.msk [vmem:[%s1712 + $0xc0] sm:$0xff] %vm300, %v1629
        %1720 = vst.msk [vmem:[%s1712 + $0xc8] sm:$0xff] %vm300, %v1631
        %1721 = vst.msk [vmem:[%s1712 + $0x100] sm:$0xff] %vm300, %v1633
        %1722 = vst.msk [vmem:[%s1712 + $0x108] sm:$0xff] %vm300, %v1635
        %1723 = vst.msk [vmem:[%s1712 + $0x140] sm:$0xff] %vm300, %v1637
        %1724 = vst.msk [vmem:[%s1712 + $0x148] sm:$0xff] %vm300, %v1639
        %1725 = vst.msk [vmem:[%s1712 + $0x180] sm:$0xff] %vm300, %v1641
        %1726 = vst.msk [vmem:[%s1712 + $0x188] sm:$0xff] %vm300, %v1643
        %1727 = vst.msk [vmem:[%s1712 + $0x1c0] sm:$0xff] %vm300, %v1645
        %1728 = vst.msk [vmem:[%s1712 + $0x1c8] sm:$0xff] %vm300, %v1647
        %1729 = vst.msk [vmem:[%s1712 + $0x200] sm:$0xff] %vm300, %v1649
        %1730 = vst.msk [vmem:[%s1712 + $0x208] sm:$0xff] %vm300, %v1651
        %1731 = vst.msk [vmem:[%s1712 + $0x240] sm:$0xff] %vm300, %v1653
        %1732 = vst.msk [vmem:[%s1712 + $0x248] sm:$0xff] %vm300, %v1655
        %1733 = vst.msk [vmem:[%s1712 + $0x280] sm:$0xff] %vm300, %v1657
        %1734 = vst.msk [vmem:[%s1712 + $0x288] sm:$0xff] %vm300, %v1659
        %1735 = vst.msk [vmem:[%s1712 + $0x2c0] sm:$0xff] %vm300, %v1661
        %1736 = vst.msk [vmem:[%s1712 + $0x2c8] sm:$0xff] %vm300, %v1663
        %1737 = vst.msk [vmem:[%s1712 + $0x300] sm:$0xff] %vm300, %v1665
        %1738 = vst.msk [vmem:[%s1712 + $0x308] sm:$0xff] %vm300, %v1667
        %1739 = vst.msk [vmem:[%s1712 + $0x340] sm:$0xff] %vm300, %v1669
        %1740 = vst.msk [vmem:[%s1712 + $0x348] sm:$0xff] %vm300, %v1671
        %1741 = vst.msk [vmem:[%s1712 + $0x380] sm:$0xff] %vm300, %v1673
        %1742 = vst.msk [vmem:[%s1712 + $0x388] sm:$0xff] %vm300, %v1675
        %1743 = vst.msk [vmem:[%s1712 + $0x3c0] sm:$0xff] %vm300, %v1677
        %1744 = vst.msk [vmem:[%s1712 + $0x3c8] sm:$0xff] %vm300, %v1679
        %s1745 = smul.u32 16, %s20
        %p1746 = scmp.lt.s32.totalorder %s1745, 31
        %s1747 = scalar_select %p1746, %s1745, 31
        %s1748 = smul.addr %s1747, 8
        %s1749 = smul.addr %s1748, 8
        %s1750 = scalar_lea.vmem %s5, %s1749
        // Predicated region
        $region49: #{_lambda_.1} parent=39 // pred_check
          %p1751 = pneg %p148
        $region50: #{_lambda_.1} parent=39 // pred_check_branch
          %1753 = sbr.rel (%p1751) target = $region52
        $region51: #{_lambda_.1} parent=39 // pred_region
          %s1754 = smul.u32 16, %s20
        $region52: #{_lambda_.1} parent=39 // pred_fallthru
          _
      $region40: #{_lambda_.1} parent=5 // pred_fallthru
        _
      %p1755 = scmp.le.s32.totalorder 2, %s15
      // Predicated region
      $region53: #{_lambda_.1} parent=5 // pred_check
        %p1756 = pneg %p1755
      $region54: #{_lambda_.1} parent=5 // pred_check_branch
        %1758 = sbr.rel (%p1756) target = $region56
      $region55: #{_lambda_.1} parent=5 // pred_region
        %s1759 = ssub.s32 %s15, 2
        // Predicated region
        $region57: #{_lambda_.1} parent=55 // pred_check
          %p1760 = pneg %p154
        $region58: #{_lambda_.1} parent=55 // pred_check_branch
          %1762 = sbr.rel (%p1760) target = $region60
        $region59: #{_lambda_.1} parent=55 // pred_region
          %s1763 = smul.u32 16, %s21
          %p1764 = scmp.lt.s32.totalorder %s1763, 31
          %s1765 = scalar_select %p1764, %s1763, 31
          %s1766 = smul.addr %s1765, 8
          %s1767 = smul.addr %s1766, 8
          %s1768 = scalar_lea.vmem %s5, %s1767
        $region60: #{_lambda_.1} parent=55 // pred_fallthru
          _
      $region56: #{_lambda_.1} parent=5 // pred_fallthru
        _
    $region6: #{_lambda_.1} parent=1 // loop_footer
      %s19 = sadd.s32 1, %s15
    $region7: #{_lambda_.1} parent=1 // loop_footer_branch
      %14 = sbr.rel target = $region3
    $region8: #{_lambda_.1} parent=1 // loop_exit
      _
    %1769 = vsyncpa [#allocation3], 1
    %s1770 = scalar_lea.sflag [#allocation3], 1
    %1771 = vsyncpa %s1770, 1
    %1772 = vsyncpa [#allocation5], 1

</llo_original>
